<compile_context>
chip_gen: v6e
topology: v6e:2x2x1
jax: 0.10.0
libtpu: 0.0.40
codegen_flags: <defaults>
</compile_context>

<pallas_src>
import math

import jax
import jax.numpy as jnp
from jax import lax
from jax.experimental import pallas as pl
from jax.experimental.pallas import tpu as pltpu


def _make_peg_kernel(*, H, W, N, C, k, p, LP, Wext, Rc, cpb, Rb, tb, H_scr):
    """Build the PEG kernel closed over all static configuration."""
    base = LP - p  # scratch column read by tap kw=0 for output column 0

    def kernel(x_ref, w_ref, b_ref, o_ref, img_ref):
        # x_ref  : (1, N, C)        raw tokens of this batch (resident across bands)
        # w_ref  : (k*k, C)         f32 depthwise taps, residual folded into centre
        # b_ref  : (1, C)           f32 bias
        # o_ref  : (1, tb, C)       one band of flattened output tokens
        # img_ref: (H_scr, Wext, C) VMEM scratch: zero-halo padded image
        r = pl.program_id(1)

        @pl.when(r == 0)
        def _build_padded_image():
            zdt = img_ref.dtype
            # --- halo-only zeroing: the interior is fully overwritten below,
            # so only the strips the conv window can actually read are cleared.
            if p > 0:
                img_ref[pl.ds(0, p), :, :] = jnp.zeros((p, Wext, C), zdt)
            if H_scr > p + H:
                img_ref[pl.ds(p + H, H_scr - p - H), :, :] = (
                    jnp.zeros((H_scr - p - H, Wext, C), zdt))
            if p > 0:
                img_ref[pl.ds(p, H), pl.ds(LP - p, p), :] = jnp.zeros((H, p, C), zdt)
                img_ref[pl.ds(p, H), pl.ds(LP + W, p), :] = jnp.zeros((H, p, C), zdt)

            # --- interior: bulk copies.  Interior starts at column LP (8-aligned)
            # so these row stores are sublane-aligned.
            full_rows = N // W
            if full_rows > 0:                       # rows of purely real tokens
                img_ref[pl.ds(p, full_rows), pl.ds(LP, W), :] = (
                    x_ref[0, pl.ds(0, full_rows * W), :].reshape(full_rows, W, C))
            a = N - full_rows * W
            if a > 0:                               # straddle row: a real + (W-a) repeats
                row = p + full_rows
                img_ref[row, pl.ds(LP, a), :] = x_ref[0, pl.ds(full_rows * W, a), :]
                img_ref[row, pl.ds(LP + a, W - a), :] = x_ref[0, pl.ds(0, W - a), :]
            rstart = full_rows + (1 if a > 0 else 0)
            nrep = H - rstart
            if nrep > 0:                            # fully-repeated rows (contiguous in x)
                img_ref[pl.ds(p + rstart, nrep), pl.ds(LP, W), :] = (
                    x_ref[0, pl.ds(rstart * W - N, nrep * W), :].reshape(nrep, W, C))

        # Taps / bias are tiny; load once per grid step (already f32, residual
        # folded into the centre tap in the wrapper).
        w_all = w_ref[...]          # (k*k, C)
        bias = b_ref[0, :]          # (C,)

        row0 = r * Rb
        for c in range(cpb):
            tok0 = c * Rc * W
            n_tok = min(Rc * W, tb - tok0)
            if n_tok <= 0:
                continue
            # One aligned slab load + one f32 cast per chunk (kw-outer reorder).
            slab = img_ref[pl.ds(row0 + c * Rc, Rc + k - 1), :, :].astype(jnp.float32)
            # Bias seeds the accumulator; the residual lives in w[centre].
            acc = jnp.broadcast_to(bias, (Rc, W, C))
            for kw in range(k):
                shift = (Wext - (base + kw)) % Wext
                rolled = pltpu.roll(slab, shift, axis=1) if shift else slab
                win_full = rolled[:, :W, :]         # (Rc + k - 1, W, C)
                for kh in range(k):
                    tap = w_all[kh * k + kw]        # (C,), lane-aligned broadcast
                    # leading-axis slice of a value: free
                    acc = acc + win_full[kh:kh + Rc, :, :] * tap
            flat = acc.reshape(Rc * W, C)
            o_ref[0, pl.ds(tok0, n_tok), :] = flat[:n_tok, :].astype(o_ref.dtype)

    return kernel


def peg_forward(x, weight, bias=None, k=7, *, chunk_rows=None, band_rows=None):
    """PEG forward.

    x: (B, N, C); weight: (C, 1, k, k) (PyTorch depthwise layout); bias: (C,) or None.
    Works for any float dtype (e.g. bf16 I/O); accumulation is fp32 in-kernel.
    """
    B, N, C = x.shape
    H = int(math.ceil(math.sqrt(N)))
    W = H
    p = k // 2

    if bias is None:
        bias = jnp.zeros((C,), jnp.float32)

    # Depthwise taps as (k*k, C) f32 rows; fold the residual into the centre tap.
    w_rows = jnp.transpose(weight[:, 0, :, :], (1, 2, 0)).reshape(k * k, C)
    w_rows = w_rows.astype(jnp.float32).at[p * k + p, :].add(1.0)
    b_row = bias.reshape(1, C).astype(jnp.float32)

    # ---- tiling -------------------------------------------------------------
    Hn = -(-N // W)                       # image rows that hold kept tokens
    step = 8 // math.gcd(W, 8)            # min rows so rows*W is a multiple of 8
    if chunk_rows is None:
        Rc = max(1, (64 * 1024) // (W * C * 4))   # keep the fp32 acc register-friendly
    else:
        Rc = int(chunk_rows)
    Rc = max(step, (Rc // step) * step)
    Rc = min(Rc, -(-Hn // step) * step)
    target = 32 if band_rows is None else int(band_rows)
    cpb = min(max(1, target // Rc), -(-Hn // Rc))   # chunks per band
    Rb = cpb * Rc                                    # image rows per grid step
    n_bands = -(-Hn // Rb)
    tb = N if n_bands == 1 else Rb * W               # out block token dim (mult of 8 or N)

    # Padded-image scratch geometry: interior starts at an 8-aligned column LP.
    LP = ((p + 7) // 8) * 8
    Wext = ((LP + W + p + 7) // 8) * 8
    H_scr = max(H, n_bands * Rb) + 2 * p

    kernel = _make_peg_kernel(H=H, W=W, N=N, C=C, k=k, p=p, LP=LP, Wext=Wext,
                              Rc=Rc, cpb=cpb, Rb=Rb, tb=tb, H_scr=H_scr)

    itemsize = jnp.dtype(x.dtype).itemsize
    need = (2 * N * C * itemsize                     # resident x block (double buffered)
            + 2 * tb * C * itemsize                  # output band blocks
            + H_scr * Wext * C * itemsize            # padded-image scratch
            + 2 * (k * k + 1) * C * 4                # weights + bias
            + 3 * (Rc + k - 1) * Wext * C * 4        # slab / rolled f32 temporaries
            + Rc * W * C * 4)                        # accumulator headroom
    vmem_limit = int(min(100 * 1024 * 1024,
                         max(32 * 1024 * 1024, need + 2 * 1024 * 1024)))

    return pl.pallas_call(
        kernel,
        out_shape=jax.ShapeDtypeStruct((B, N, C), x.dtype),
        grid_spec=pltpu.PrefetchScalarGridSpec(
            num_scalar_prefetch=0,
            grid=(B, n_bands),
            in_specs=[
                pl.BlockSpec((1, N, C), lambda b, r: (b, 0, 0)),
                pl.BlockSpec((k * k, C), lambda b, r: (0, 0)),
                pl.BlockSpec((1, C), lambda b, r: (0, 0)),
            ],
            out_specs=pl.BlockSpec((1, tb, C), lambda b, r: (b, r, 0)),
            scratch_shapes=[pltpu.VMEM((H_scr, Wext, C), x.dtype)],
        ),
        compiler_params=pltpu.CompilerParams(
            dimension_semantics=("parallel", "arbitrary"),
            vmem_limit_bytes=vmem_limit),
    )(x, w_rows, b_row)


def _reference(x, weight, bias, k=7):
    """Pure-JAX reference matching the PyTorch module (NCHW depthwise conv)."""
    B, N, C = x.shape
    H = int(math.ceil(math.sqrt(N)))
    W = H
    add_length = H * W - N
    p = k // 2
    x_seq = jnp.concatenate([x, x[:, :add_length, :]], axis=1)
    cnn_feat = jnp.transpose(x_seq, (0, 2, 1)).reshape(B, C, H, W)
    conv = lax.conv_general_dilated(
        cnn_feat, weight, window_strides=(1, 1), padding=[(p, p), (p, p)],
        feature_group_count=C, dimension_numbers=("NCHW", "OIHW", "NCHW"))
    y = conv + bias.reshape(1, C, 1, 1) + cnn_feat
    y = jnp.transpose(y.reshape(B, C, H * W), (0, 2, 1))
    if add_length > 0:
        y = y[:, :-add_length]
    return y


if __name__ == "__main__":
    key = jax.random.PRNGKey(0)
    C, k = 128, 7

    configs = [
        # (B, N, chunk_rows, band_rows)
        (2, 60, None, None),   # H = W = 8, 4 repeated tokens; single-band fast path
        (2, 60, 2, 4),         # forced 2-row chunks, 2 chunks/band, 2 bands (+ masked tail)
        (2, 60, 2, 2),         # 1 chunk/band, 4 bands
        (1, 50, None, None),   # a whole row of repeated tokens, single batch
        (2, 64, None, None),   # add_length == 0 edge case
    ]
    for (B, N, chunk_rows, band_rows) in configs:
        kx, kw_, kb, key = jax.random.split(key, 4)
        x = jax.random.normal(kx, (B, N, C), dtype=jnp.float32)
        weight = jax.random.normal(kw_, (C, 1, k, k), dtype=jnp.float32) * (1.0 / k)
        bias = jax.random.normal(kb, (C,), dtype=jnp.float32) * 0.1

        out = jax.block_until_ready(
            peg_forward(x, weight, bias, k=k,
                        chunk_rows=chunk_rows, band_rows=band_rows))
        ref = jax.block_until_ready(_reference(x, weight, bias, k=k))

        assert out.shape == (B, N, C), (out.shape, (B, N, C))
        err = float(jnp.max(jnp.abs(out - ref)))
        assert err < 1e-3, (
            f"mismatch vs reference (max abs err {err}) for "
            f"B={B} N={N} chunk_rows={chunk_rows} band_rows={band_rows}")

    print("KERNEL_OK")
</pallas_src>

<mosaic_0001>
module attributes {stable_mosaic.version = 11 : i64} {
  func.func @kernel(%arg0: i32, %arg1: i32, %arg2: memref<1x60x128xf32, #tpu.memory_space<vmem>>, %arg3: memref<49x128xf32, #tpu.memory_space<vmem>>, %arg4: memref<1x128xf32, #tpu.memory_space<vmem>>, %arg5: memref<1x60x128xf32, #tpu.memory_space<vmem>>, %arg6: memref<14x24x128xf32, #tpu.memory_space<vmem>>) attributes {dimension_semantics = [#tpu.dimension_semantics<parallel>, #tpu.dimension_semantics<arbitrary>], iteration_bounds = array<i64: 2, 1>, scalar_prefetch = 0 : i64, scratch_operands = 1 : i64, tpu.core_type = #tpu.core_type<tc>, window_params = [{transform_indices = @transform_0, window_bounds = array<i64: 1, 60, 128>}, {pipeline_mode = #tpu.pipeline_mode<synchronous>, transform_indices = @transform_1, window_bounds = array<i64: 49, 128>}, {pipeline_mode = #tpu.pipeline_mode<synchronous>, transform_indices = @transform_2, window_bounds = array<i64: 1, 128>}, {transform_indices = @transform_3, window_bounds = array<i64: 1, 60, 128>}]} {
    %c0_i32 = arith.constant 0 : i32
    %0 = arith.cmpi eq, %arg1, %c0_i32 : i32
    %1 = arith.extui %0 : i1 to i32
    %c0_i32_0 = arith.constant 0 : i32
    %2 = arith.cmpi ne, %1, %c0_i32_0 : i32
    scf.if %2 {
      %cst = arith.constant 0.000000e+00 : f32
      %374 = vector.broadcast %cst : f32 to vector<3x24x128xf32>
      %c0_10 = arith.constant 0 : index
      %c0_11 = arith.constant 0 : index
      %c0_12 = arith.constant 0 : index
      %375 = vector.load %arg6[%c0_10, %c0_11, %c0_12] : memref<14x24x128xf32, #tpu.memory_space<vmem>>, vector<3x24x128xf32>
      tpu.vector_store %arg6[%c0_10, %c0_11, %c0_12], %374 {strides = array<i32>} : memref<14x24x128xf32, #tpu.memory_space<vmem>>, vector<3x24x128xf32>,
      %cst_13 = arith.constant 0.000000e+00 : f32
      %376 = vector.broadcast %cst_13 : f32 to vector<3x24x128xf32>
      %c11 = arith.constant 11 : index
      %c0_14 = arith.constant 0 : index
      %c0_15 = arith.constant 0 : index
      %377 = vector.load %arg6[%c11, %c0_14, %c0_15] : memref<14x24x128xf32, #tpu.memory_space<vmem>>, vector<3x24x128xf32>
      tpu.vector_store %arg6[%c11, %c0_14, %c0_15], %376 {strides = array<i32>} : memref<14x24x128xf32, #tpu.memory_space<vmem>>, vector<3x24x128xf32>,
      %cst_16 = arith.constant 0.000000e+00 : f32
      %378 = vector.broadcast %cst_16 : f32 to vector<8x3x128xf32>
      %c3 = arith.constant 3 : index
      %c5 = arith.constant 5 : index
      %c0_17 = arith.constant 0 : index
      %379 = vector.load %arg6[%c3, %c5, %c0_17] : memref<14x24x128xf32, #tpu.memory_space<vmem>>, vector<8x3x128xf32>
      tpu.vector_store %arg6[%c3, %c5, %c0_17], %378 {strides = array<i32>} : memref<14x24x128xf32, #tpu.memory_space<vmem>>, vector<8x3x128xf32>,
      %cst_18 = arith.constant 0.000000e+00 : f32
      %380 = vector.broadcast %cst_18 : f32 to vector<8x3x128xf32>
      %c3_19 = arith.constant 3 : index
      %c16 = arith.constant 16 : index
      %c0_20 = arith.constant 0 : index
      %381 = vector.load %arg6[%c3_19, %c16, %c0_20] : memref<14x24x128xf32, #tpu.memory_space<vmem>>, vector<8x3x128xf32>
      tpu.vector_store %arg6[%c3_19, %c16, %c0_20], %380 {strides = array<i32>} : memref<14x24x128xf32, #tpu.memory_space<vmem>>, vector<8x3x128xf32>,
      %c0_21 = arith.constant 0 : index
      %c0_22 = arith.constant 0 : index
      %c0_23 = arith.constant 0 : index
      %382 = vector.load %arg2[%c0_21, %c0_22, %c0_23] : memref<1x60x128xf32, #tpu.memory_space<vmem>>, vector<1x56x128xf32>
      %383 = vector.shape_cast %382 : vector<1x56x128xf32> to vector<56x128xf32>
      %384 = vector.shape_cast %383 : vector<56x128xf32> to vector<7x8x128xf32>
      %c3_24 = arith.constant 3 : index
      %c8 = arith.constant 8 : index
      %c0_25 = arith.constant 0 : index
      %385 = vector.load %arg6[%c3_24, %c8, %c0_25] : memref<14x24x128xf32, #tpu.memory_space<vmem>>, vector<7x8x128xf32>
      tpu.vector_store %arg6[%c3_24, %c8, %c0_25], %384 {strides = array<i32>} : memref<14x24x128xf32, #tpu.memory_space<vmem>>, vector<7x8x128xf32>,
      %c0_26 = arith.constant 0 : index
      %c56 = arith.constant 56 : index
      %c0_27 = arith.constant 0 : index
      %386 = vector.load %arg2[%c0_26, %c56, %c0_27] : memref<1x60x128xf32, #tpu.memory_space<vmem>>, vector<1x4x128xf32>
      %387 = vector.shape_cast %386 : vector<1x4x128xf32> to vector<4x128xf32>
      %c10 = arith.constant 10 : index
      %c8_28 = arith.constant 8 : index
      %c0_29 = arith.constant 0 : index
      %388 = vector.load %arg6[%c10, %c8_28, %c0_29] : memref<14x24x128xf32, #tpu.memory_space<vmem>>, vector<1x4x128xf32>
      %389 = vector.shape_cast %388 : vector<1x4x128xf32> to vector<4x128xf32>
      %390 = vector.shape_cast %387 : vector<4x128xf32> to vector<1x4x128xf32>
      tpu.vector_store %arg6[%c10, %c8_28, %c0_29], %390 {strides = array<i32>} : memref<14x24x128xf32, #tpu.memory_space<vmem>>, vector<1x4x128xf32>,
      %c0_30 = arith.constant 0 : index
      %c0_31 = arith.constant 0 : index
      %c0_32 = arith.constant 0 : index
      %391 = vector.load %arg2[%c0_30, %c0_31, %c0_32] : memref<1x60x128xf32, #tpu.memory_space<vmem>>, vector<1x4x128xf32>
      %392 = vector.shape_cast %391 : vector<1x4x128xf32> to vector<4x128xf32>
      %c10_33 = arith.constant 10 : index
      %c12 = arith.constant 12 : index
      %c0_34 = arith.constant 0 : index
      %393 = vector.load %arg6[%c10_33, %c12, %c0_34] : memref<14x24x128xf32, #tpu.memory_space<vmem>>, vector<1x4x128xf32>
      %394 = vector.shape_cast %393 : vector<1x4x128xf32> to vector<4x128xf32>
      %395 = vector.shape_cast %392 : vector<4x128xf32> to vector<1x4x128xf32>
      tpu.vector_store %arg6[%c10_33, %c12, %c0_34], %395 {strides = array<i32>} : memref<14x24x128xf32, #tpu.memory_space<vmem>>, vector<1x4x128xf32>,
    } else {
    }
    %c0 = arith.constant 0 : index
    %c0_1 = arith.constant 0 : index
    %3 = vector.load %arg3[%c0, %c0_1] : memref<49x128xf32, #tpu.memory_space<vmem>>, vector<49x128xf32>
    %c0_2 = arith.constant 0 : index
    %c0_3 = arith.constant 0 : index
    %4 = vector.load %arg4[%c0_2, %c0_3] : memref<1x128xf32, #tpu.memory_space<vmem>>, vector<1x128xf32>
    %5 = vector.shape_cast %4 : vector<1x128xf32> to vector<128xf32>
    %c8_i32 = arith.constant 8 : i32
    %6 = arith.muli %arg1, %c8_i32 : i32
    %c0_i32_4 = arith.constant 0 : i32
    %7 = arith.addi %6, %c0_i32_4 : i32
    %8 = arith.index_cast %7 : i32 to index
    %c0_5 = arith.constant 0 : index
    %c0_6 = arith.constant 0 : index
    %9 = vector.load %arg6[%8, %c0_5, %c0_6] : memref<14x24x128xf32, #tpu.memory_space<vmem>>, vector<14x24x128xf32>
    %10 = vector.shape_cast %5 : vector<128xf32> to vector<1x1x128xf32>
    %11 = vector.broadcast %10 : vector<1x1x128xf32> to vector<8x8x128xf32>
    %c19_i32 = arith.constant 19 : i32
    %12 = tpu.dynamic_rotate %9 by %c19_i32 dim 1 : vector<14x24x128xf32>, i32 -> vector<14x24x128xf32>
    %13 = vector.extract_strided_slice %12 {offsets = [0, 0, 0], sizes = [14, 8, 128], strides = [1, 1, 1]} : vector<14x24x128xf32> to vector<14x8x128xf32>
    %14 = vector.extract_strided_slice %3 {offsets = [0, 0], sizes = [1, 128], strides = [1, 1]} : vector<49x128xf32> to vector<1x128xf32>
    %15 = vector.shape_cast %14 : vector<1x128xf32> to vector<128xf32>
    %16 = vector.extract_strided_slice %13 {offsets = [0, 0, 0], sizes = [8, 8, 128], strides = [1, 1, 1]} : vector<14x8x128xf32> to vector<8x8x128xf32>
    %17 = vector.shape_cast %15 : vector<128xf32> to vector<1x1x128xf32>
    %18 = vector.broadcast %17 : vector<1x1x128xf32> to vector<8x8x128xf32>
    %19 = arith.mulf %16, %18 : vector<8x8x128xf32>
    %20 = arith.addf %11, %19 : vector<8x8x128xf32>
    %21 = vector.extract_strided_slice %3 {offsets = [7, 0], sizes = [1, 128], strides = [1, 1]} : vector<49x128xf32> to vector<1x128xf32>
    %22 = vector.shape_cast %21 : vector<1x128xf32> to vector<128xf32>
    %23 = vector.extract_strided_slice %13 {offsets = [1, 0, 0], sizes = [8, 8, 128], strides = [1, 1, 1]} : vector<14x8x128xf32> to vector<8x8x128xf32>
    %24 = vector.shape_cast %22 : vector<128xf32> to vector<1x1x128xf32>
    %25 = vector.broadcast %24 : vector<1x1x128xf32> to vector<8x8x128xf32>
    %26 = arith.mulf %23, %25 : vector<8x8x128xf32>
    %27 = arith.addf %20, %26 : vector<8x8x128xf32>
    %28 = vector.extract_strided_slice %3 {offsets = [14, 0], sizes = [1, 128], strides = [1, 1]} : vector<49x128xf32> to vector<1x128xf32>
    %29 = vector.shape_cast %28 : vector<1x128xf32> to vector<128xf32>
    %30 = vector.extract_strided_slice %13 {offsets = [2, 0, 0], sizes = [8, 8, 128], strides = [1, 1, 1]} : vector<14x8x128xf32> to vector<8x8x128xf32>
    %31 = vector.shape_cast %29 : vector<128xf32> to vector<1x1x128xf32>
    %32 = vector.broadcast %31 : vector<1x1x128xf32> to vector<8x8x128xf32>
    %33 = arith.mulf %30, %32 : vector<8x8x128xf32>
    %34 = arith.addf %27, %33 : vector<8x8x128xf32>
    %35 = vector.extract_strided_slice %3 {offsets = [21, 0], sizes = [1, 128], strides = [1, 1]} : vector<49x128xf32> to vector<1x128xf32>
    %36 = vector.shape_cast %35 : vector<1x128xf32> to vector<128xf32>
    %37 = vector.extract_strided_slice %13 {offsets = [3, 0, 0], sizes = [8, 8, 128], strides = [1, 1, 1]} : vector<14x8x128xf32> to vector<8x8x128xf32>
    %38 = vector.shape_cast %36 : vector<128xf32> to vector<1x1x128xf32>
    %39 = vector.broadcast %38 : vector<1x1x128xf32> to vector<8x8x128xf32>
    %40 = arith.mulf %37, %39 : vector<8x8x128xf32>
    %41 = arith.addf %34, %40 : vector<8x8x128xf32>
    %42 = vector.extract_strided_slice %3 {offsets = [28, 0], sizes = [1, 128], strides = [1, 1]} : vector<49x128xf32> to vector<1x128xf32>
    %43 = vector.shape_cast %42 : vector<1x128xf32> to vector<128xf32>
    %44 = vector.extract_strided_slice %13 {offsets = [4, 0, 0], sizes = [8, 8, 128], strides = [1, 1, 1]} : vector<14x8x128xf32> to vector<8x8x128xf32>
    %45 = vector.shape_cast %43 : vector<128xf32> to vector<1x1x128xf32>
    %46 = vector.broadcast %45 : vector<1x1x128xf32> to vector<8x8x128xf32>
    %47 = arith.mulf %44, %46 : vector<8x8x128xf32>
    %48 = arith.addf %41, %47 : vector<8x8x128xf32>
    %49 = vector.extract_strided_slice %3 {offsets = [35, 0], sizes = [1, 128], strides = [1, 1]} : vector<49x128xf32> to vector<1x128xf32>
    %50 = vector.shape_cast %49 : vector<1x128xf32> to vector<128xf32>
    %51 = vector.extract_strided_slice %13 {offsets = [5, 0, 0], sizes = [8, 8, 128], strides = [1, 1, 1]} : vector<14x8x128xf32> to vector<8x8x128xf32>
    %52 = vector.shape_cast %50 : vector<128xf32> to vector<1x1x128xf32>
    %53 = vector.broadcast %52 : vector<1x1x128xf32> to vector<8x8x128xf32>
    %54 = arith.mulf %51, %53 : vector<8x8x128xf32>
    %55 = arith.addf %48, %54 : vector<8x8x128xf32>
    %56 = vector.extract_strided_slice %3 {offsets = [42, 0], sizes = [1, 128], strides = [1, 1]} : vector<49x128xf32> to vector<1x128xf32>
    %57 = vector.shape_cast %56 : vector<1x128xf32> to vector<128xf32>
    %58 = vector.extract_strided_slice %13 {offsets = [6, 0, 0], sizes = [8, 8, 128], strides = [1, 1, 1]} : vector<14x8x128xf32> to vector<8x8x128xf32>
    %59 = vector.shape_cast %57 : vector<128xf32> to vector<1x1x128xf32>
    %60 = vector.broadcast %59 : vector<1x1x128xf32> to vector<8x8x128xf32>
    %61 = arith.mulf %58, %60 : vector<8x8x128xf32>
    %62 = arith.addf %55, %61 : vector<8x8x128xf32>
    %c18_i32 = arith.constant 18 : i32
    %63 = tpu.dynamic_rotate %9 by %c18_i32 dim 1 : vector<14x24x128xf32>, i32 -> vector<14x24x128xf32>
    %64 = vector.extract_strided_slice %63 {offsets = [0, 0, 0], sizes = [14, 8, 128], strides = [1, 1, 1]} : vector<14x24x128xf32> to vector<14x8x128xf32>
    %65 = vector.extract_strided_slice %3 {offsets = [1, 0], sizes = [1, 128], strides = [1, 1]} : vector<49x128xf32> to vector<1x128xf32>
    %66 = vector.shape_cast %65 : vector<1x128xf32> to vector<128xf32>
    %67 = vector.extract_strided_slice %64 {offsets = [0, 0, 0], sizes = [8, 8, 128], strides = [1, 1, 1]} : vector<14x8x128xf32> to vector<8x8x128xf32>
    %68 = vector.shape_cast %66 : vector<128xf32> to vector<1x1x128xf32>
    %69 = vector.broadcast %68 : vector<1x1x128xf32> to vector<8x8x128xf32>
    %70 = arith.mulf %67, %69 : vector<8x8x128xf32>
    %71 = arith.addf %62, %70 : vector<8x8x128xf32>
    %72 = vector.extract_strided_slice %3 {offsets = [8, 0], sizes = [1, 128], strides = [1, 1]} : vector<49x128xf32> to vector<1x128xf32>
    %73 = vector.shape_cast %72 : vector<1x128xf32> to vector<128xf32>
    %74 = vector.extract_strided_slice %64 {offsets = [1, 0, 0], sizes = [8, 8, 128], strides = [1, 1, 1]} : vector<14x8x128xf32> to vector<8x8x128xf32>
    %75 = vector.shape_cast %73 : vector<128xf32> to vector<1x1x128xf32>
    %76 = vector.broadcast %75 : vector<1x1x128xf32> to vector<8x8x128xf32>
    %77 = arith.mulf %74, %76 : vector<8x8x128xf32>
    %78 = arith.addf %71, %77 : vector<8x8x128xf32>
    %79 = vector.extract_strided_slice %3 {offsets = [15, 0], sizes = [1, 128], strides = [1, 1]} : vector<49x128xf32> to vector<1x128xf32>
    %80 = vector.shape_cast %79 : vector<1x128xf32> to vector<128xf32>
    %81 = vector.extract_strided_slice %64 {offsets = [2, 0, 0], sizes = [8, 8, 128], strides = [1, 1, 1]} : vector<14x8x128xf32> to vector<8x8x128xf32>
    %82 = vector.shape_cast %80 : vector<128xf32> to vector<1x1x128xf32>
    %83 = vector.broadcast %82 : vector<1x1x128xf32> to vector<8x8x128xf32>
    %84 = arith.mulf %81, %83 : vector<8x8x128xf32>
    %85 = arith.addf %78, %84 : vector<8x8x128xf32>
    %86 = vector.extract_strided_slice %3 {offsets = [22, 0], sizes = [1, 128], strides = [1, 1]} : vector<49x128xf32> to vector<1x128xf32>
    %87 = vector.shape_cast %86 : vector<1x128xf32> to vector<128xf32>
    %88 = vector.extract_strided_slice %64 {offsets = [3, 0, 0], sizes = [8, 8, 128], strides = [1, 1, 1]} : vector<14x8x128xf32> to vector<8x8x128xf32>
    %89 = vector.shape_cast %87 : vector<128xf32> to vector<1x1x128xf32>
    %90 = vector.broadcast %89 : vector<1x1x128xf32> to vector<8x8x128xf32>
    %91 = arith.mulf %88, %90 : vector<8x8x128xf32>
    %92 = arith.addf %85, %91 : vector<8x8x128xf32>
    %93 = vector.extract_strided_slice %3 {offsets = [29, 0], sizes = [1, 128], strides = [1, 1]} : vector<49x128xf32> to vector<1x128xf32>
    %94 = vector.shape_cast %93 : vector<1x128xf32> to vector<128xf32>
    %95 = vector.extract_strided_slice %64 {offsets = [4, 0, 0], sizes = [8, 8, 128], strides = [1, 1, 1]} : vector<14x8x128xf32> to vector<8x8x128xf32>
    %96 = vector.shape_cast %94 : vector<128xf32> to vector<1x1x128xf32>
    %97 = vector.broadcast %96 : vector<1x1x128xf32> to vector<8x8x128xf32>
    %98 = arith.mulf %95, %97 : vector<8x8x128xf32>
    %99 = arith.addf %92, %98 : vector<8x8x128xf32>
    %100 = vector.extract_strided_slice %3 {offsets = [36, 0], sizes = [1, 128], strides = [1, 1]} : vector<49x128xf32> to vector<1x128xf32>
    %101 = vector.shape_cast %100 : vector<1x128xf32> to vector<128xf32>
    %102 = vector.extract_strided_slice %64 {offsets = [5, 0, 0], sizes = [8, 8, 128], strides = [1, 1, 1]} : vector<14x8x128xf32> to vector<8x8x128xf32>
    %103 = vector.shape_cast %101 : vector<128xf32> to vector<1x1x128xf32>
    %104 = vector.broadcast %103 : vector<1x1x128xf32> to vector<8x8x128xf32>
    %105 = arith.mulf %102, %104 : vector<8x8x128xf32>
    %106 = arith.addf %99, %105 : vector<8x8x128xf32>
    %107 = vector.extract_strided_slice %3 {offsets = [43, 0], sizes = [1, 128], strides = [1, 1]} : vector<49x128xf32> to vector<1x128xf32>
    %108 = vector.shape_cast %107 : vector<1x128xf32> to vector<128xf32>
    %109 = vector.extract_strided_slice %64 {offsets = [6, 0, 0], sizes = [8, 8, 128], strides = [1, 1, 1]} : vector<14x8x128xf32> to vector<8x8x128xf32>
    %110 = vector.shape_cast %108 : vector<128xf32> to vector<1x1x128xf32>
    %111 = vector.broadcast %110 : vector<1x1x128xf32> to vector<8x8x128xf32>
    %112 = arith.mulf %109, %111 : vector<8x8x128xf32>
    %113 = arith.addf %106, %112 : vector<8x8x128xf32>
    %c17_i32 = arith.constant 17 : i32
    %114 = tpu.dynamic_rotate %9 by %c17_i32 dim 1 : vector<14x24x128xf32>, i32 -> vector<14x24x128xf32>
    %115 = vector.extract_strided_slice %114 {offsets = [0, 0, 0], sizes = [14, 8, 128], strides = [1, 1, 1]} : vector<14x24x128xf32> to vector<14x8x128xf32>
    %116 = vector.extract_strided_slice %3 {offsets = [2, 0], sizes = [1, 128], strides = [1, 1]} : vector<49x128xf32> to vector<1x128xf32>
    %117 = vector.shape_cast %116 : vector<1x128xf32> to vector<128xf32>
    %118 = vector.extract_strided_slice %115 {offsets = [0, 0, 0], sizes = [8, 8, 128], strides = [1, 1, 1]} : vector<14x8x128xf32> to vector<8x8x128xf32>
    %119 = vector.shape_cast %117 : vector<128xf32> to vector<1x1x128xf32>
    %120 = vector.broadcast %119 : vector<1x1x128xf32> to vector<8x8x128xf32>
    %121 = arith.mulf %118, %120 : vector<8x8x128xf32>
    %122 = arith.addf %113, %121 : vector<8x8x128xf32>
    %123 = vector.extract_strided_slice %3 {offsets = [9, 0], sizes = [1, 128], strides = [1, 1]} : vector<49x128xf32> to vector<1x128xf32>
    %124 = vector.shape_cast %123 : vector<1x128xf32> to vector<128xf32>
    %125 = vector.extract_strided_slice %115 {offsets = [1, 0, 0], sizes = [8, 8, 128], strides = [1, 1, 1]} : vector<14x8x128xf32> to vector<8x8x128xf32>
    %126 = vector.shape_cast %124 : vector<128xf32> to vector<1x1x128xf32>
    %127 = vector.broadcast %126 : vector<1x1x128xf32> to vector<8x8x128xf32>
    %128 = arith.mulf %125, %127 : vector<8x8x128xf32>
    %129 = arith.addf %122, %128 : vector<8x8x128xf32>
    %130 = vector.extract_strided_slice %3 {offsets = [16, 0], sizes = [1, 128], strides = [1, 1]} : vector<49x128xf32> to vector<1x128xf32>
    %131 = vector.shape_cast %130 : vector<1x128xf32> to vector<128xf32>
    %132 = vector.extract_strided_slice %115 {offsets = [2, 0, 0], sizes = [8, 8, 128], strides = [1, 1, 1]} : vector<14x8x128xf32> to vector<8x8x128xf32>
    %133 = vector.shape_cast %131 : vector<128xf32> to vector<1x1x128xf32>
    %134 = vector.broadcast %133 : vector<1x1x128xf32> to vector<8x8x128xf32>
    %135 = arith.mulf %132, %134 : vector<8x8x128xf32>
    %136 = arith.addf %129, %135 : vector<8x8x128xf32>
    %137 = vector.extract_strided_slice %3 {offsets = [23, 0], sizes = [1, 128], strides = [1, 1]} : vector<49x128xf32> to vector<1x128xf32>
    %138 = vector.shape_cast %137 : vector<1x128xf32> to vector<128xf32>
    %139 = vector.extract_strided_slice %115 {offsets = [3, 0, 0], sizes = [8, 8, 128], strides = [1, 1, 1]} : vector<14x8x128xf32> to vector<8x8x128xf32>
    %140 = vector.shape_cast %138 : vector<128xf32> to vector<1x1x128xf32>
    %141 = vector.broadcast %140 : vector<1x1x128xf32> to vector<8x8x128xf32>
    %142 = arith.mulf %139, %141 : vector<8x8x128xf32>
    %143 = arith.addf %136, %142 : vector<8x8x128xf32>
    %144 = vector.extract_strided_slice %3 {offsets = [30, 0], sizes = [1, 128], strides = [1, 1]} : vector<49x128xf32> to vector<1x128xf32>
    %145 = vector.shape_cast %144 : vector<1x128xf32> to vector<128xf32>
    %146 = vector.extract_strided_slice %115 {offsets = [4, 0, 0], sizes = [8, 8, 128], strides = [1, 1, 1]} : vector<14x8x128xf32> to vector<8x8x128xf32>
    %147 = vector.shape_cast %145 : vector<128xf32> to vector<1x1x128xf32>
    %148 = vector.broadcast %147 : vector<1x1x128xf32> to vector<8x8x128xf32>
    %149 = arith.mulf %146, %148 : vector<8x8x128xf32>
    %150 = arith.addf %143, %149 : vector<8x8x128xf32>
    %151 = vector.extract_strided_slice %3 {offsets = [37, 0], sizes = [1, 128], strides = [1, 1]} : vector<49x128xf32> to vector<1x128xf32>
    %152 = vector.shape_cast %151 : vector<1x128xf32> to vector<128xf32>
    %153 = vector.extract_strided_slice %115 {offsets = [5, 0, 0], sizes = [8, 8, 128], strides = [1, 1, 1]} : vector<14x8x128xf32> to vector<8x8x128xf32>
    %154 = vector.shape_cast %152 : vector<128xf32> to vector<1x1x128xf32>
    %155 = vector.broadcast %154 : vector<1x1x128xf32> to vector<8x8x128xf32>
    %156 = arith.mulf %153, %155 : vector<8x8x128xf32>
    %157 = arith.addf %150, %156 : vector<8x8x128xf32>
    %158 = vector.extract_strided_slice %3 {offsets = [44, 0], sizes = [1, 128], strides = [1, 1]} : vector<49x128xf32> to vector<1x128xf32>
    %159 = vector.shape_cast %158 : vector<1x128xf32> to vector<128xf32>
    %160 = vector.extract_strided_slice %115 {offsets = [6, 0, 0], sizes = [8, 8, 128], strides = [1, 1, 1]} : vector<14x8x128xf32> to vector<8x8x128xf32>
    %161 = vector.shape_cast %159 : vector<128xf32> to vector<1x1x128xf32>
    %162 = vector.broadcast %161 : vector<1x1x128xf32> to vector<8x8x128xf32>
    %163 = arith.mulf %160, %162 : vector<8x8x128xf32>
    %164 = arith.addf %157, %163 : vector<8x8x128xf32>
    %c16_i32 = arith.constant 16 : i32
    %165 = tpu.dynamic_rotate %9 by %c16_i32 dim 1 : vector<14x24x128xf32>, i32 -> vector<14x24x128xf32>
    %166 = vector.extract_strided_slice %165 {offsets = [0, 0, 0], sizes = [14, 8, 128], strides = [1, 1, 1]} : vector<14x24x128xf32> to vector<14x8x128xf32>
    %167 = vector.extract_strided_slice %3 {offsets = [3, 0], sizes = [1, 128], strides = [1, 1]} : vector<49x128xf32> to vector<1x128xf32>
    %168 = vector.shape_cast %167 : vector<1x128xf32> to vector<128xf32>
    %169 = vector.extract_strided_slice %166 {offsets = [0, 0, 0], sizes = [8, 8, 128], strides = [1, 1, 1]} : vector<14x8x128xf32> to vector<8x8x128xf32>
    %170 = vector.shape_cast %168 : vector<128xf32> to vector<1x1x128xf32>
    %171 = vector.broadcast %170 : vector<1x1x128xf32> to vector<8x8x128xf32>
    %172 = arith.mulf %169, %171 : vector<8x8x128xf32>
    %173 = arith.addf %164, %172 : vector<8x8x128xf32>
    %174 = vector.extract_strided_slice %3 {offsets = [10, 0], sizes = [1, 128], strides = [1, 1]} : vector<49x128xf32> to vector<1x128xf32>
    %175 = vector.shape_cast %174 : vector<1x128xf32> to vector<128xf32>
    %176 = vector.extract_strided_slice %166 {offsets = [1, 0, 0], sizes = [8, 8, 128], strides = [1, 1, 1]} : vector<14x8x128xf32> to vector<8x8x128xf32>
    %177 = vector.shape_cast %175 : vector<128xf32> to vector<1x1x128xf32>
    %178 = vector.broadcast %177 : vector<1x1x128xf32> to vector<8x8x128xf32>
    %179 = arith.mulf %176, %178 : vector<8x8x128xf32>
    %180 = arith.addf %173, %179 : vector<8x8x128xf32>
    %181 = vector.extract_strided_slice %3 {offsets = [17, 0], sizes = [1, 128], strides = [1, 1]} : vector<49x128xf32> to vector<1x128xf32>
    %182 = vector.shape_cast %181 : vector<1x128xf32> to vector<128xf32>
    %183 = vector.extract_strided_slice %166 {offsets = [2, 0, 0], sizes = [8, 8, 128], strides = [1, 1, 1]} : vector<14x8x128xf32> to vector<8x8x128xf32>
    %184 = vector.shape_cast %182 : vector<128xf32> to vector<1x1x128xf32>
    %185 = vector.broadcast %184 : vector<1x1x128xf32> to vector<8x8x128xf32>
    %186 = arith.mulf %183, %185 : vector<8x8x128xf32>
    %187 = arith.addf %180, %186 : vector<8x8x128xf32>
    %188 = vector.extract_strided_slice %3 {offsets = [24, 0], sizes = [1, 128], strides = [1, 1]} : vector<49x128xf32> to vector<1x128xf32>
    %189 = vector.shape_cast %188 : vector<1x128xf32> to vector<128xf32>
    %190 = vector.extract_strided_slice %166 {offsets = [3, 0, 0], sizes = [8, 8, 128], strides = [1, 1, 1]} : vector<14x8x128xf32> to vector<8x8x128xf32>
    %191 = vector.shape_cast %189 : vector<128xf32> to vector<1x1x128xf32>
    %192 = vector.broadcast %191 : vector<1x1x128xf32> to vector<8x8x128xf32>
    %193 = arith.mulf %190, %192 : vector<8x8x128xf32>
    %194 = arith.addf %187, %193 : vector<8x8x128xf32>
    %195 = vector.extract_strided_slice %3 {offsets = [31, 0], sizes = [1, 128], strides = [1, 1]} : vector<49x128xf32> to vector<1x128xf32>
    %196 = vector.shape_cast %195 : vector<1x128xf32> to vector<128xf32>
    %197 = vector.extract_strided_slice %166 {offsets = [4, 0, 0], sizes = [8, 8, 128], strides = [1, 1, 1]} : vector<14x8x128xf32> to vector<8x8x128xf32>
    %198 = vector.shape_cast %196 : vector<128xf32> to vector<1x1x128xf32>
    %199 = vector.broadcast %198 : vector<1x1x128xf32> to vector<8x8x128xf32>
    %200 = arith.mulf %197, %199 : vector<8x8x128xf32>
    %201 = arith.addf %194, %200 : vector<8x8x128xf32>
    %202 = vector.extract_strided_slice %3 {offsets = [38, 0], sizes = [1, 128], strides = [1, 1]} : vector<49x128xf32> to vector<1x128xf32>
    %203 = vector.shape_cast %202 : vector<1x128xf32> to vector<128xf32>
    %204 = vector.extract_strided_slice %166 {offsets = [5, 0, 0], sizes = [8, 8, 128], strides = [1, 1, 1]} : vector<14x8x128xf32> to vector<8x8x128xf32>
    %205 = vector.shape_cast %203 : vector<128xf32> to vector<1x1x128xf32>
    %206 = vector.broadcast %205 : vector<1x1x128xf32> to vector<8x8x128xf32>
    %207 = arith.mulf %204, %206 : vector<8x8x128xf32>
    %208 = arith.addf %201, %207 : vector<8x8x128xf32>
    %209 = vector.extract_strided_slice %3 {offsets = [45, 0], sizes = [1, 128], strides = [1, 1]} : vector<49x128xf32> to vector<1x128xf32>
    %210 = vector.shape_cast %209 : vector<1x128xf32> to vector<128xf32>
    %211 = vector.extract_strided_slice %166 {offsets = [6, 0, 0], sizes = [8, 8, 128], strides = [1, 1, 1]} : vector<14x8x128xf32> to vector<8x8x128xf32>
    %212 = vector.shape_cast %210 : vector<128xf32> to vector<1x1x128xf32>
    %213 = vector.broadcast %212 : vector<1x1x128xf32> to vector<8x8x128xf32>
    %214 = arith.mulf %211, %213 : vector<8x8x128xf32>
    %215 = arith.addf %208, %214 : vector<8x8x128xf32>
    %c15_i32 = arith.constant 15 : i32
    %216 = tpu.dynamic_rotate %9 by %c15_i32 dim 1 : vector<14x24x128xf32>, i32 -> vector<14x24x128xf32>
    %217 = vector.extract_strided_slice %216 {offsets = [0, 0, 0], sizes = [14, 8, 128], strides = [1, 1, 1]} : vector<14x24x128xf32> to vector<14x8x128xf32>
    %218 = vector.extract_strided_slice %3 {offsets = [4, 0], sizes = [1, 128], strides = [1, 1]} : vector<49x128xf32> to vector<1x128xf32>
    %219 = vector.shape_cast %218 : vector<1x128xf32> to vector<128xf32>
    %220 = vector.extract_strided_slice %217 {offsets = [0, 0, 0], sizes = [8, 8, 128], strides = [1, 1, 1]} : vector<14x8x128xf32> to vector<8x8x128xf32>
    %221 = vector.shape_cast %219 : vector<128xf32> to vector<1x1x128xf32>
    %222 = vector.broadcast %221 : vector<1x1x128xf32> to vector<8x8x128xf32>
    %223 = arith.mulf %220, %222 : vector<8x8x128xf32>
    %224 = arith.addf %215, %223 : vector<8x8x128xf32>
    %225 = vector.extract_strided_slice %3 {offsets = [11, 0], sizes = [1, 128], strides = [1, 1]} : vector<49x128xf32> to vector<1x128xf32>
    %226 = vector.shape_cast %225 : vector<1x128xf32> to vector<128xf32>
    %227 = vector.extract_strided_slice %217 {offsets = [1, 0, 0], sizes = [8, 8, 128], strides = [1, 1, 1]} : vector<14x8x128xf32> to vector<8x8x128xf32>
    %228 = vector.shape_cast %226 : vector<128xf32> to vector<1x1x128xf32>
    %229 = vector.broadcast %228 : vector<1x1x128xf32> to vector<8x8x128xf32>
    %230 = arith.mulf %227, %229 : vector<8x8x128xf32>
    %231 = arith.addf %224, %230 : vector<8x8x128xf32>
    %232 = vector.extract_strided_slice %3 {offsets = [18, 0], sizes = [1, 128], strides = [1, 1]} : vector<49x128xf32> to vector<1x128xf32>
    %233 = vector.shape_cast %232 : vector<1x128xf32> to vector<128xf32>
    %234 = vector.extract_strided_slice %217 {offsets = [2, 0, 0], sizes = [8, 8, 128], strides = [1, 1, 1]} : vector<14x8x128xf32> to vector<8x8x128xf32>
    %235 = vector.shape_cast %233 : vector<128xf32> to vector<1x1x128xf32>
    %236 = vector.broadcast %235 : vector<1x1x128xf32> to vector<8x8x128xf32>
    %237 = arith.mulf %234, %236 : vector<8x8x128xf32>
    %238 = arith.addf %231, %237 : vector<8x8x128xf32>
    %239 = vector.extract_strided_slice %3 {offsets = [25, 0], sizes = [1, 128], strides = [1, 1]} : vector<49x128xf32> to vector<1x128xf32>
    %240 = vector.shape_cast %239 : vector<1x128xf32> to vector<128xf32>
    %241 = vector.extract_strided_slice %217 {offsets = [3, 0, 0], sizes = [8, 8, 128], strides = [1, 1, 1]} : vector<14x8x128xf32> to vector<8x8x128xf32>
    %242 = vector.shape_cast %240 : vector<128xf32> to vector<1x1x128xf32>
    %243 = vector.broadcast %242 : vector<1x1x128xf32> to vector<8x8x128xf32>
    %244 = arith.mulf %241, %243 : vector<8x8x128xf32>
    %245 = arith.addf %238, %244 : vector<8x8x128xf32>
    %246 = vector.extract_strided_slice %3 {offsets = [32, 0], sizes = [1, 128], strides = [1, 1]} : vector<49x128xf32> to vector<1x128xf32>
    %247 = vector.shape_cast %246 : vector<1x128xf32> to vector<128xf32>
    %248 = vector.extract_strided_slice %217 {offsets = [4, 0, 0], sizes = [8, 8, 128], strides = [1, 1, 1]} : vector<14x8x128xf32> to vector<8x8x128xf32>
    %249 = vector.shape_cast %247 : vector<128xf32> to vector<1x1x128xf32>
    %250 = vector.broadcast %249 : vector<1x1x128xf32> to vector<8x8x128xf32>
    %251 = arith.mulf %248, %250 : vector<8x8x128xf32>
    %252 = arith.addf %245, %251 : vector<8x8x128xf32>
    %253 = vector.extract_strided_slice %3 {offsets = [39, 0], sizes = [1, 128], strides = [1, 1]} : vector<49x128xf32> to vector<1x128xf32>
    %254 = vector.shape_cast %253 : vector<1x128xf32> to vector<128xf32>
    %255 = vector.extract_strided_slice %217 {offsets = [5, 0, 0], sizes = [8, 8, 128], strides = [1, 1, 1]} : vector<14x8x128xf32> to vector<8x8x128xf32>
    %256 = vector.shape_cast %254 : vector<128xf32> to vector<1x1x128xf32>
    %257 = vector.broadcast %256 : vector<1x1x128xf32> to vector<8x8x128xf32>
    %258 = arith.mulf %255, %257 : vector<8x8x128xf32>
    %259 = arith.addf %252, %258 : vector<8x8x128xf32>
    %260 = vector.extract_strided_slice %3 {offsets = [46, 0], sizes = [1, 128], strides = [1, 1]} : vector<49x128xf32> to vector<1x128xf32>
    %261 = vector.shape_cast %260 : vector<1x128xf32> to vector<128xf32>
    %262 = vector.extract_strided_slice %217 {offsets = [6, 0, 0], sizes = [8, 8, 128], strides = [1, 1, 1]} : vector<14x8x128xf32> to vector<8x8x128xf32>
    %263 = vector.shape_cast %261 : vector<128xf32> to vector<1x1x128xf32>
    %264 = vector.broadcast %263 : vector<1x1x128xf32> to vector<8x8x128xf32>
    %265 = arith.mulf %262, %264 : vector<8x8x128xf32>
    %266 = arith.addf %259, %265 : vector<8x8x128xf32>
    %c14_i32 = arith.constant 14 : i32
    %267 = tpu.dynamic_rotate %9 by %c14_i32 dim 1 : vector<14x24x128xf32>, i32 -> vector<14x24x128xf32>
    %268 = vector.extract_strided_slice %267 {offsets = [0, 0, 0], sizes = [14, 8, 128], strides = [1, 1, 1]} : vector<14x24x128xf32> to vector<14x8x128xf32>
    %269 = vector.extract_strided_slice %3 {offsets = [5, 0], sizes = [1, 128], strides = [1, 1]} : vector<49x128xf32> to vector<1x128xf32>
    %270 = vector.shape_cast %269 : vector<1x128xf32> to vector<128xf32>
    %271 = vector.extract_strided_slice %268 {offsets = [0, 0, 0], sizes = [8, 8, 128], strides = [1, 1, 1]} : vector<14x8x128xf32> to vector<8x8x128xf32>
    %272 = vector.shape_cast %270 : vector<128xf32> to vector<1x1x128xf32>
    %273 = vector.broadcast %272 : vector<1x1x128xf32> to vector<8x8x128xf32>
    %274 = arith.mulf %271, %273 : vector<8x8x128xf32>
    %275 = arith.addf %266, %274 : vector<8x8x128xf32>
    %276 = vector.extract_strided_slice %3 {offsets = [12, 0], sizes = [1, 128], strides = [1, 1]} : vector<49x128xf32> to vector<1x128xf32>
    %277 = vector.shape_cast %276 : vector<1x128xf32> to vector<128xf32>
    %278 = vector.extract_strided_slice %268 {offsets = [1, 0, 0], sizes = [8, 8, 128], strides = [1, 1, 1]} : vector<14x8x128xf32> to vector<8x8x128xf32>
    %279 = vector.shape_cast %277 : vector<128xf32> to vector<1x1x128xf32>
    %280 = vector.broadcast %279 : vector<1x1x128xf32> to vector<8x8x128xf32>
    %281 = arith.mulf %278, %280 : vector<8x8x128xf32>
    %282 = arith.addf %275, %281 : vector<8x8x128xf32>
    %283 = vector.extract_strided_slice %3 {offsets = [19, 0], sizes = [1, 128], strides = [1, 1]} : vector<49x128xf32> to vector<1x128xf32>
    %284 = vector.shape_cast %283 : vector<1x128xf32> to vector<128xf32>
    %285 = vector.extract_strided_slice %268 {offsets = [2, 0, 0], sizes = [8, 8, 128], strides = [1, 1, 1]} : vector<14x8x128xf32> to vector<8x8x128xf32>
    %286 = vector.shape_cast %284 : vector<128xf32> to vector<1x1x128xf32>
    %287 = vector.broadcast %286 : vector<1x1x128xf32> to vector<8x8x128xf32>
    %288 = arith.mulf %285, %287 : vector<8x8x128xf32>
    %289 = arith.addf %282, %288 : vector<8x8x128xf32>
    %290 = vector.extract_strided_slice %3 {offsets = [26, 0], sizes = [1, 128], strides = [1, 1]} : vector<49x128xf32> to vector<1x128xf32>
    %291 = vector.shape_cast %290 : vector<1x128xf32> to vector<128xf32>
    %292 = vector.extract_strided_slice %268 {offsets = [3, 0, 0], sizes = [8, 8, 128], strides = [1, 1, 1]} : vector<14x8x128xf32> to vector<8x8x128xf32>
    %293 = vector.shape_cast %291 : vector<128xf32> to vector<1x1x128xf32>
    %294 = vector.broadcast %293 : vector<1x1x128xf32> to vector<8x8x128xf32>
    %295 = arith.mulf %292, %294 : vector<8x8x128xf32>
    %296 = arith.addf %289, %295 : vector<8x8x128xf32>
    %297 = vector.extract_strided_slice %3 {offsets = [33, 0], sizes = [1, 128], strides = [1, 1]} : vector<49x128xf32> to vector<1x128xf32>
    %298 = vector.shape_cast %297 : vector<1x128xf32> to vector<128xf32>
    %299 = vector.extract_strided_slice %268 {offsets = [4, 0, 0], sizes = [8, 8, 128], strides = [1, 1, 1]} : vector<14x8x128xf32> to vector<8x8x128xf32>
    %300 = vector.shape_cast %298 : vector<128xf32> to vector<1x1x128xf32>
    %301 = vector.broadcast %300 : vector<1x1x128xf32> to vector<8x8x128xf32>
    %302 = arith.mulf %299, %301 : vector<8x8x128xf32>
    %303 = arith.addf %296, %302 : vector<8x8x128xf32>
    %304 = vector.extract_strided_slice %3 {offsets = [40, 0], sizes = [1, 128], strides = [1, 1]} : vector<49x128xf32> to vector<1x128xf32>
    %305 = vector.shape_cast %304 : vector<1x128xf32> to vector<128xf32>
    %306 = vector.extract_strided_slice %268 {offsets = [5, 0, 0], sizes = [8, 8, 128], strides = [1, 1, 1]} : vector<14x8x128xf32> to vector<8x8x128xf32>
    %307 = vector.shape_cast %305 : vector<128xf32> to vector<1x1x128xf32>
    %308 = vector.broadcast %307 : vector<1x1x128xf32> to vector<8x8x128xf32>
    %309 = arith.mulf %306, %308 : vector<8x8x128xf32>
    %310 = arith.addf %303, %309 : vector<8x8x128xf32>
    %311 = vector.extract_strided_slice %3 {offsets = [47, 0], sizes = [1, 128], strides = [1, 1]} : vector<49x128xf32> to vector<1x128xf32>
    %312 = vector.shape_cast %311 : vector<1x128xf32> to vector<128xf32>
    %313 = vector.extract_strided_slice %268 {offsets = [6, 0, 0], sizes = [8, 8, 128], strides = [1, 1, 1]} : vector<14x8x128xf32> to vector<8x8x128xf32>
    %314 = vector.shape_cast %312 : vector<128xf32> to vector<1x1x128xf32>
    %315 = vector.broadcast %314 : vector<1x1x128xf32> to vector<8x8x128xf32>
    %316 = arith.mulf %313, %315 : vector<8x8x128xf32>
    %317 = arith.addf %310, %316 : vector<8x8x128xf32>
    %c13_i32 = arith.constant 13 : i32
    %318 = tpu.dynamic_rotate %9 by %c13_i32 dim 1 : vector<14x24x128xf32>, i32 -> vector<14x24x128xf32>
    %319 = vector.extract_strided_slice %318 {offsets = [0, 0, 0], sizes = [14, 8, 128], strides = [1, 1, 1]} : vector<14x24x128xf32> to vector<14x8x128xf32>
    %320 = vector.extract_strided_slice %3 {offsets = [6, 0], sizes = [1, 128], strides = [1, 1]} : vector<49x128xf32> to vector<1x128xf32>
    %321 = vector.shape_cast %320 : vector<1x128xf32> to vector<128xf32>
    %322 = vector.extract_strided_slice %319 {offsets = [0, 0, 0], sizes = [8, 8, 128], strides = [1, 1, 1]} : vector<14x8x128xf32> to vector<8x8x128xf32>
    %323 = vector.shape_cast %321 : vector<128xf32> to vector<1x1x128xf32>
    %324 = vector.broadcast %323 : vector<1x1x128xf32> to vector<8x8x128xf32>
    %325 = arith.mulf %322, %324 : vector<8x8x128xf32>
    %326 = arith.addf %317, %325 : vector<8x8x128xf32>
    %327 = vector.extract_strided_slice %3 {offsets = [13, 0], sizes = [1, 128], strides = [1, 1]} : vector<49x128xf32> to vector<1x128xf32>
    %328 = vector.shape_cast %327 : vector<1x128xf32> to vector<128xf32>
    %329 = vector.extract_strided_slice %319 {offsets = [1, 0, 0], sizes = [8, 8, 128], strides = [1, 1, 1]} : vector<14x8x128xf32> to vector<8x8x128xf32>
    %330 = vector.shape_cast %328 : vector<128xf32> to vector<1x1x128xf32>
    %331 = vector.broadcast %330 : vector<1x1x128xf32> to vector<8x8x128xf32>
    %332 = arith.mulf %329, %331 : vector<8x8x128xf32>
    %333 = arith.addf %326, %332 : vector<8x8x128xf32>
    %334 = vector.extract_strided_slice %3 {offsets = [20, 0], sizes = [1, 128], strides = [1, 1]} : vector<49x128xf32> to vector<1x128xf32>
    %335 = vector.shape_cast %334 : vector<1x128xf32> to vector<128xf32>
    %336 = vector.extract_strided_slice %319 {offsets = [2, 0, 0], sizes = [8, 8, 128], strides = [1, 1, 1]} : vector<14x8x128xf32> to vector<8x8x128xf32>
    %337 = vector.shape_cast %335 : vector<128xf32> to vector<1x1x128xf32>
    %338 = vector.broadcast %337 : vector<1x1x128xf32> to vector<8x8x128xf32>
    %339 = arith.mulf %336, %338 : vector<8x8x128xf32>
    %340 = arith.addf %333, %339 : vector<8x8x128xf32>
    %341 = vector.extract_strided_slice %3 {offsets = [27, 0], sizes = [1, 128], strides = [1, 1]} : vector<49x128xf32> to vector<1x128xf32>
    %342 = vector.shape_cast %341 : vector<1x128xf32> to vector<128xf32>
    %343 = vector.extract_strided_slice %319 {offsets = [3, 0, 0], sizes = [8, 8, 128], strides = [1, 1, 1]} : vector<14x8x128xf32> to vector<8x8x128xf32>
    %344 = vector.shape_cast %342 : vector<128xf32> to vector<1x1x128xf32>
    %345 = vector.broadcast %344 : vector<1x1x128xf32> to vector<8x8x128xf32>
    %346 = arith.mulf %343, %345 : vector<8x8x128xf32>
    %347 = arith.addf %340, %346 : vector<8x8x128xf32>
    %348 = vector.extract_strided_slice %3 {offsets = [34, 0], sizes = [1, 128], strides = [1, 1]} : vector<49x128xf32> to vector<1x128xf32>
    %349 = vector.shape_cast %348 : vector<1x128xf32> to vector<128xf32>
    %350 = vector.extract_strided_slice %319 {offsets = [4, 0, 0], sizes = [8, 8, 128], strides = [1, 1, 1]} : vector<14x8x128xf32> to vector<8x8x128xf32>
    %351 = vector.shape_cast %349 : vector<128xf32> to vector<1x1x128xf32>
    %352 = vector.broadcast %351 : vector<1x1x128xf32> to vector<8x8x128xf32>
    %353 = arith.mulf %350, %352 : vector<8x8x128xf32>
    %354 = arith.addf %347, %353 : vector<8x8x128xf32>
    %355 = vector.extract_strided_slice %3 {offsets = [41, 0], sizes = [1, 128], strides = [1, 1]} : vector<49x128xf32> to vector<1x128xf32>
    %356 = vector.shape_cast %355 : vector<1x128xf32> to vector<128xf32>
    %357 = vector.extract_strided_slice %319 {offsets = [5, 0, 0], sizes = [8, 8, 128], strides = [1, 1, 1]} : vector<14x8x128xf32> to vector<8x8x128xf32>
    %358 = vector.shape_cast %356 : vector<128xf32> to vector<1x1x128xf32>
    %359 = vector.broadcast %358 : vector<1x1x128xf32> to vector<8x8x128xf32>
    %360 = arith.mulf %357, %359 : vector<8x8x128xf32>
    %361 = arith.addf %354, %360 : vector<8x8x128xf32>
    %362 = vector.extract_strided_slice %3 {offsets = [48, 0], sizes = [1, 128], strides = [1, 1]} : vector<49x128xf32> to vector<1x128xf32>
    %363 = vector.shape_cast %362 : vector<1x128xf32> to vector<128xf32>
    %364 = vector.extract_strided_slice %319 {offsets = [6, 0, 0], sizes = [8, 8, 128], strides = [1, 1, 1]} : vector<14x8x128xf32> to vector<8x8x128xf32>
    %365 = vector.shape_cast %363 : vector<128xf32> to vector<1x1x128xf32>
    %366 = vector.broadcast %365 : vector<1x1x128xf32> to vector<8x8x128xf32>
    %367 = arith.mulf %364, %366 : vector<8x8x128xf32>
    %368 = arith.addf %361, %367 : vector<8x8x128xf32>
    %369 = vector.shape_cast %368 : vector<8x8x128xf32> to vector<64x128xf32>
    %370 = vector.extract_strided_slice %369 {offsets = [0, 0], sizes = [60, 128], strides = [1, 1]} : vector<64x128xf32> to vector<60x128xf32>
    %c0_7 = arith.constant 0 : index
    %c0_8 = arith.constant 0 : index
    %c0_9 = arith.constant 0 : index
    %371 = vector.load %arg5[%c0_7, %c0_8, %c0_9] : memref<1x60x128xf32, #tpu.memory_space<vmem>>, vector<1x60x128xf32>
    %372 = vector.shape_cast %371 : vector<1x60x128xf32> to vector<60x128xf32>
    %373 = vector.shape_cast %370 : vector<60x128xf32> to vector<1x60x128xf32>
    tpu.vector_store %arg5[%c0_7, %c0_8, %c0_9], %373 {strides = array<i32>} : memref<1x60x128xf32, #tpu.memory_space<vmem>>, vector<1x60x128xf32>,
    return
  }
  func.func @transform_0(%arg0: i32, %arg1: i32) -> (i32, i32, i32) {
    %c0_i32 = arith.constant 0 : i32
    %c0_i32_0 = arith.constant 0 : i32
    %c0_i32_1 = arith.constant 0 : i32
    return %arg0, %c0_i32, %c0_i32_0 : i32, i32, i32
  }
  func.func @transform_1(%arg0: i32, %arg1: i32) -> (i32, i32) {
    %c0_i32 = arith.constant 0 : i32
    %c0_i32_0 = arith.constant 0 : i32
    %c0_i32_1 = arith.constant 0 : i32
    return %c0_i32, %c0_i32_0 : i32, i32
  }
  func.func @transform_2(%arg0: i32, %arg1: i32) -> (i32, i32) {
    %c0_i32 = arith.constant 0 : i32
    %c0_i32_0 = arith.constant 0 : i32
    %c0_i32_1 = arith.constant 0 : i32
    return %c0_i32, %c0_i32_0 : i32, i32
  }
  func.func @transform_3(%arg0: i32, %arg1: i32) -> (i32, i32, i32) {
    %c0_i32 = arith.constant 0 : i32
    %c0_i32_0 = arith.constant 0 : i32
    return %arg0, %arg1, %c0_i32 : i32, i32, i32
  }
}

</mosaic_0001>

<llo_original>
// kernel: tpu_custom_call.1
$region0: #{tpu_custom_call.1}
  #allocation0 [shape = 'u32[]', space=smem, size = 0x4, offset = 0x4, fixed_abs, tag = 'smem constant byte address 0x4 - core index']
  #allocation1 [shape = 'u32[144,128]{1,0:T(1,128)}', space=vmem, size = 0x12000, scoped, tag = 'internal scratch']
  #allocation2 [shape = 'f32[14,24,128]{2,1,0:T(8,128)}', space=vmem, size = 0x2a000, scoped, tag = 'scratch operand']
  %s0 = inlined_call_operand.vmem [shape: f32[2,60,128], index: 0, kind: input, shape index: {}]
  %s1 = inlined_call_operand.vmem [shape: f32[49,128], index: 1, kind: input, shape index: {}]
  %s2 = inlined_call_operand.vmem [shape: f32[1,128], index: 2, kind: input, shape index: {}]
  %s3 = inlined_call_operand.vmem [shape: f32[2,60,128], index: 3, kind: output, shape index: {}]
  %s4 = sld [smem:[#allocation0]]
  $region49: #{tpu_custom_call.1} parent=0
    _
  %s6 = ssub.s32 1, %s4
  %s7 = scalar_select 0, %s6, %s4
  loop: start=0, step=1, limit=4
  $region2: #{tpu_custom_call.1} parent=0 // loop_pre_header
    _
  $region3: #{tpu_custom_call.1} parent=0 // loop_header
    %s9 = sphi 0, %s13
    %p10 = scmp.ge.s32.totalorder %s9, 4
    %s16 = sphi 0, %s28
    %s17 = sphi 0, %s24
    %s18 = sphi 0, %s16
    %s19 = sphi 0, %s17
    %s20 = sphi 0, %s18
    %s21 = sphi 0, %s19
    %s31 = sphi 0, %s33
    %s34 = sphi 0, %s31
    %s35 = sphi 0, %s34
    %s51 = sphi 0, %s35
    %s55 = sphi 0, %s55
    %s57 = sphi 0, %s55
    %s58 = sphi 0, %s57
    %s72 = sphi 0, %s58
    %s76 = sphi 0, %s76
    %s78 = sphi 0, %s76
    %s79 = sphi 0, %s78
    %s93 = sphi 0, %s79
    %s101 = sphi 0, %s103
    %s104 = sphi 0, %s101
    %s105 = sphi 0, %s104
    %s121 = sphi 0, %s105
  $region4: #{tpu_custom_call.1} parent=0 // loop_header_branch
    %12 = sbr.rel (%p10) target = $region8
  $region5: #{tpu_custom_call.1} parent=0 // loop_body
    %s14 = ssub.s32 %s9, 1
    %s15 = ssub.s32 %s9, 2
    %s22 = sadd.s32 1, %s17
    %p23 = scmp.ge.s32.totalorder %s22, 1
    %s24 = scalar_select %p23, 0, %s22
    %s25 = sadd.s32 1, %s16
    %s26 = scalar_select %p23, %s25, %s16
    %p27 = scmp.ge.s32.totalorder %s26, 2
    %s28 = scalar_select %p27, 0, %s26
    %s29 = ssub.s32 %s16, %s28
    %p30 = scmp.eq.s32.totalorder %s29, 0
    %s32 = sadd.s32 %s31, 1
    %s33 = scalar_select %p30, %s31, %s32
    %p36 = pneg %p30
    %p37 = scmp.eq.s32.totalorder %s9, 1
    %p38 = por %p36, %p37
    %p39 = scmp.ne.s32.totalorder %s31, %s34
    %p40 = scmp.eq.s32.totalorder %s9, 0
    %p41 = por %p39, %p40
    %p42 = scmp.ne.s32.totalorder %s31, %s34
    %p43 = scmp.eq.s32.totalorder %s14, 1
    %p44 = por %p42, %p43
    %p45 = scmp.ne.s32.totalorder %s34, %s35
    %p46 = scmp.eq.s32.totalorder %s14, 0
    %p47 = por %p45, %p46
    %p48 = scmp.ne.s32.totalorder %s34, %s35
    %p49 = scmp.eq.s32.totalorder %s15, 1
    %p50 = por %p48, %p49
    %p52 = scmp.ne.s32.totalorder %s35, %s51
    %p53 = scmp.eq.s32.totalorder %s15, 0
    %p54 = por %p52, %p53
    %s56 = sadd.s32 %s55, 1
    %p59 = scmp.eq.s32.totalorder %s9, 1
    %p60 = scmp.ne.s32.totalorder %s55, %s57
    %p61 = scmp.eq.s32.totalorder %s9, 0
    %p62 = por %p60, %p61
    %p63 = scmp.ne.s32.totalorder %s55, %s57
    %p64 = scmp.eq.s32.totalorder %s14, 1
    %p65 = por %p63, %p64
    %p66 = scmp.ne.s32.totalorder %s57, %s58
    %p67 = scmp.eq.s32.totalorder %s14, 0
    %p68 = por %p66, %p67
    %p69 = scmp.ne.s32.totalorder %s57, %s58
    %p70 = scmp.eq.s32.totalorder %s15, 1
    %p71 = por %p69, %p70
    %p73 = scmp.ne.s32.totalorder %s58, %s72
    %p74 = scmp.eq.s32.totalorder %s15, 0
    %p75 = por %p73, %p74
    %s77 = sadd.s32 %s76, 1
    %p80 = scmp.eq.s32.totalorder %s9, 1
    %p81 = scmp.ne.s32.totalorder %s76, %s78
    %p82 = scmp.eq.s32.totalorder %s9, 0
    %p83 = por %p81, %p82
    %p84 = scmp.ne.s32.totalorder %s76, %s78
    %p85 = scmp.eq.s32.totalorder %s14, 1
    %p86 = por %p84, %p85
    %p87 = scmp.ne.s32.totalorder %s78, %s79
    %p88 = scmp.eq.s32.totalorder %s14, 0
    %p89 = por %p87, %p88
    %p90 = scmp.ne.s32.totalorder %s78, %s79
    %p91 = scmp.eq.s32.totalorder %s15, 1
    %p92 = por %p90, %p91
    %p94 = scmp.ne.s32.totalorder %s79, %s93
    %p95 = scmp.eq.s32.totalorder %s15, 0
    %p96 = por %p94, %p95
    %s97 = ssub.s32 %s16, %s28
    %s98 = ssub.s32 %s17, %s24
    %s99 = sor.u32 %s97, %s98
    %p100 = scmp.eq.s32.totalorder %s99, 0
    %s102 = sadd.s32 %s101, 1
    %s103 = scalar_select %p100, %s101, %s102
    %p106 = pneg %p100
    %p107 = scmp.eq.s32.totalorder %s9, 1
    %p108 = por %p106, %p107
    %p109 = scmp.ne.s32.totalorder %s101, %s104
    %p110 = scmp.eq.s32.totalorder %s9, 0
    %p111 = por %p109, %p110
    %p112 = scmp.ne.s32.totalorder %s101, %s104
    %p113 = scmp.eq.s32.totalorder %s14, 1
    %p114 = por %p112, %p113
    %p115 = scmp.ne.s32.totalorder %s104, %s105
    %p116 = scmp.eq.s32.totalorder %s14, 0
    %p117 = por %p115, %p116
    %p118 = scmp.ne.s32.totalorder %s104, %s105
    %p119 = scmp.eq.s32.totalorder %s15, 1
    %p120 = por %p118, %p119
    %p122 = scmp.ne.s32.totalorder %s105, %s121
    %p123 = scmp.eq.s32.totalorder %s15, 0
    %p124 = por %p122, %p123
    %p125 = scmp.le.s32.totalorder 1, %s9
    %p126 = scmp.lt.s32.totalorder %s9, 3
    %p127 = pnand %p125, %p126
    %p128 = pneg %p127
    // Predicated region
    $region9: #{tpu_custom_call.1} parent=5 // pred_check
      _
    $region10: #{tpu_custom_call.1} parent=5 // pred_check_branch
      %130 = sbr.rel (%p127) target = $region12
    $region11: #{tpu_custom_call.1} parent=5 // pred_region
      %s131 = ssub.s32 %s9, 1
      // Predicated region
      $region13: #{tpu_custom_call.1} parent=11 // pred_check
        %p132 = pneg %p68
      $region14: #{tpu_custom_call.1} parent=11 // pred_check_branch
        %134 = sbr.rel (%p132) target = $region16
      $region15: #{tpu_custom_call.1} parent=11 // pred_region
        _
      $region16: #{tpu_custom_call.1} parent=11 // pred_fallthru
        _
      // Predicated region
      $region17: #{tpu_custom_call.1} parent=11 // pred_check
        %p135 = pneg %p89
      $region18: #{tpu_custom_call.1} parent=11 // pred_check_branch
        %137 = sbr.rel (%p135) target = $region20
      $region19: #{tpu_custom_call.1} parent=11 // pred_region
        _
      $region20: #{tpu_custom_call.1} parent=11 // pred_fallthru
        _
    $region12: #{tpu_custom_call.1} parent=5 // pred_fallthru
      _
    %p138 = scmp.lt.s32.totalorder %s9, 2
    // Predicated region
    $region21: #{tpu_custom_call.1} parent=5 // pred_check
      %p139 = pneg %p138
    $region22: #{tpu_custom_call.1} parent=5 // pred_check_branch
      %141 = sbr.rel (%p139) target = $region24
    $region23: #{tpu_custom_call.1} parent=5 // pred_region
      // Predicated region
      $region25: #{tpu_custom_call.1} parent=23 // pred_check
        %p142 = pneg %p41
      $region26: #{tpu_custom_call.1} parent=23 // pred_check_branch
        %144 = sbr.rel (%p142) target = $region28
      $region27: #{tpu_custom_call.1} parent=23 // pred_region
        %p145 = scmp.lt.s32.totalorder %s16, 1
        %s146 = scalar_select %p145, %s16, 1
        %s147 = smul.addr %s146, 8
        %s148 = smul.addr %s147, 8
        %s149 = scalar_lea.vmem %s0, %s148
      $region28: #{tpu_custom_call.1} parent=23 // pred_fallthru
        _
    $region24: #{tpu_custom_call.1} parent=5 // pred_fallthru
      _
    %p150 = scmp.le.s32.totalorder 1, %s9
    %p151 = scmp.lt.s32.totalorder %s9, 3
    %p152 = pnand %p150, %p151
    %p153 = pneg %p152
    // Predicated region
    $region29: #{tpu_custom_call.1} parent=5 // pred_check
      _
    $region30: #{tpu_custom_call.1} parent=5 // pred_check_branch
      %155 = sbr.rel (%p152) target = $region32
    $region31: #{tpu_custom_call.1} parent=5 // pred_region
      %s156 = ssub.s32 %s9, 1
      %p157 = scmp.lt.s32.totalorder %s18, 1
      %s158 = scalar_select %p157, %s18, 1
      %s159 = smul.addr %s158, 8
      %s160 = smul.addr %s159, 8
      %s161 = scalar_lea.vmem %s0, %s160
      %p162 = pneg %p47
      %p163 = pneg %p44
      %p164 = pneg %p68
      %p165 = pneg %p65
      %p166 = pneg %p89
      %p167 = pneg %p86
      %p168 = pneg %p117
      %p169 = pneg %p114
      %s170 = smul.u32 8, %s19
      %p171 = scmp.lt.s32.totalorder %s18, 1
      %s172 = scalar_select %p171, %s18, 1
      %p173 = scmp.lt.s32.totalorder %s170, 7
      %s174 = scalar_select %p173, %s170, 7
      %s175 = smul.addr %s172, 8
      %s176 = sadd.s32 %s174, %s175
      %s177 = smul.addr %s176, 8
      %s178 = scalar_lea.vmem %s3, %s177
      %p179 = scmp.lt.s32.totalorder %s18, 1
      %s180 = scalar_select %p179, %s18, 1
      %s181 = smul.addr %s180, 8
      %s182 = smul.addr %s181, 8
      %s183 = scalar_lea.vmem %s0, %s182
      %s184 = smul.u32 8, %s19
      %p185 = scmp.lt.s32.totalorder %s18, 1
      %s186 = scalar_select %p185, %s18, 1
      %p187 = scmp.lt.s32.totalorder %s184, 7
      %s188 = scalar_select %p187, %s184, 7
      %s189 = smul.addr %s186, 8
      %s190 = sadd.s32 %s188, %s189
      %s191 = smul.addr %s190, 8
      %s192 = scalar_lea.vmem %s3, %s191
      %s193 = smul.u32 8, %s19
      %p194 = scmp.eq.s32.totalorder %s19, 0
      // Predicated region
      $region33: #{tpu_custom_call.1} parent=31 // pred_check
        %p195 = pneg %p194
      $region34: #{tpu_custom_call.1} parent=31 // pred_check_branch
        %197 = sbr.rel (%p195) target = $region36
      $region35: #{tpu_custom_call.1} parent=31 // pred_region
        %198 = vst [vmem:[#allocation2] sm:$0xff] 0.0
        %199 = vst [vmem:[#allocation2 + $0x8] sm:$0xff] 0.0
        %200 = vst [vmem:[#allocation2 + $0x10] sm:$0xff] 0.0
        %201 = vst [vmem:[#allocation2 + $0x18] sm:$0xff] 0.0
        %202 = vst [vmem:[#allocation2 + $0x20] sm:$0xff] 0.0
        %203 = vst [vmem:[#allocation2 + $0x28] sm:$0xff] 0.0
        %204 = vst [vmem:[#allocation2 + $0x30] sm:$0xff] 0.0
        %205 = vst [vmem:[#allocation2 + $0x38] sm:$0xff] 0.0
        %206 = vst [vmem:[#allocation2 + $0x40] sm:$0xff] 0.0
        %s207 = scalar_lea.vmem [#allocation2], 264
        %208 = vst [vmem:[%s207] sm:$0xff] 0.0
        %209 = vst [vmem:[%s207 + $0x8] sm:$0xff] 0.0
        %210 = vst [vmem:[%s207 + $0x10] sm:$0xff] 0.0
        %211 = vst [vmem:[%s207 + $0x18] sm:$0xff] 0.0
        %212 = vst [vmem:[%s207 + $0x20] sm:$0xff] 0.0
        %213 = vst [vmem:[%s207 + $0x28] sm:$0xff] 0.0
        %214 = vst [vmem:[%s207 + $0x30] sm:$0xff] 0.0
        %215 = vst [vmem:[%s207 + $0x38] sm:$0xff] 0.0
        %216 = vst [vmem:[%s207 + $0x40] sm:$0xff] 0.0
        %s217 = scalar_lea.vmem [#allocation2], 72
        %218 = vst [vmem:[%s217 + $0x5] sm:$0x7] 0.0
        %219 = vst [vmem:[%s217 + $0x1d] sm:$0x7] 0.0
        %220 = vst [vmem:[%s217 + $0x35] sm:$0x7] 0.0
        %221 = vst [vmem:[%s217 + $0x4d] sm:$0x7] 0.0
        %222 = vst [vmem:[%s217 + $0x65] sm:$0x7] 0.0
        %223 = vst [vmem:[%s217 + $0x7d] sm:$0x7] 0.0
        %224 = vst [vmem:[%s217 + $0x95] sm:$0x7] 0.0
        %225 = vst [vmem:[%s217 + $0xad] sm:$0x7] 0.0
        %226 = vst [vmem:[%s217 + $0x10] sm:$0x7] 0.0
        %227 = vst [vmem:[%s217 + $0x28] sm:$0x7] 0.0
        %228 = vst [vmem:[%s217 + $0x40] sm:$0x7] 0.0
        %229 = vst [vmem:[%s217 + $0x58] sm:$0x7] 0.0
        %230 = vst [vmem:[%s217 + $0x70] sm:$0x7] 0.0
        %231 = vst [vmem:[%s217 + $0x88] sm:$0x7] 0.0
        %232 = vst [vmem:[%s217 + $0xa0] sm:$0x7] 0.0
        %233 = vst [vmem:[%s217 + $0xb8] sm:$0x7] 0.0
        %v234 = vld [vmem:[%s183] sm:$0xff]
        %v235 = vld [vmem:[%s183 + $0x8] sm:$0xff]
        %v236 = vld [vmem:[%s183 + $0x10] sm:$0xff]
        %v237 = vld [vmem:[%s183 + $0x18] sm:$0xff]
        %v238 = vld [vmem:[%s183 + $0x20] sm:$0xff]
        %v239 = vld [vmem:[%s183 + $0x28] sm:$0xff]
        %v240 = vld [vmem:[%s183 + $0x30] sm:$0xff]
        %241 = vst [vmem:[%s217 + $0x8] sm:$0xff] %v234
        %242 = vst [vmem:[%s217 + $0x20] sm:$0xff] %v235
        %243 = vst [vmem:[%s217 + $0x38] sm:$0xff] %v236
        %244 = vst [vmem:[%s217 + $0x50] sm:$0xff] %v237
        %245 = vst [vmem:[%s217 + $0x68] sm:$0xff] %v238
        %246 = vst [vmem:[%s217 + $0x80] sm:$0xff] %v239
        %247 = vst [vmem:[%s217 + $0x98] sm:$0xff] %v240
        %v248 = vld [vmem:[%s183 + $0x38] sm:$0xf]
        %s249 = scalar_lea.vmem [#allocation2], 240
        %250 = vst [vmem:[%s249 + $0x8] sm:$0xf] %v248
        %v251 = vld [vmem:[%s183] sm:$0xf]
        %252 = vst [vmem:[%s249 + $0xc] sm:$0xf] %v251
      $region36: #{tpu_custom_call.1} parent=31 // pred_fallthru
        _
      %v253 = vld [vmem:[%s1] sm:$0xff]
      %v254 = vld [vmem:[%s1 + $0x8] sm:$0xff]
      %v255 = vld [vmem:[%s1 + $0x10] sm:$0xff]
      %v256 = vld [vmem:[%s1 + $0x18] sm:$0xff]
      %v257 = vld [vmem:[%s1 + $0x20] sm:$0xff]
      %v258 = vld [vmem:[%s1 + $0x28] sm:$0xff]
      %v259 = vld [vmem:[%s1 + $0x30] sm:$0x1]
      %v260 = vld [vmem:[%s2] sm:$0x1]
      %s261 = smul.u32 %s19, 8
      %s262 = smul.u32 %s261, 24
      %s263 = scalar_lea.vmem [#allocation2], %s262
      %v264 = vld [vmem:[%s263] sm:$0xff]
      %v265 = vld [vmem:[%s263 + $0x8] sm:$0xff]
      %v266 = vld [vmem:[%s263 + $0x10] sm:$0xff]
      %v267 = vld [vmem:[%s263 + $0x18] sm:$0xff]
      %v268 = vld [vmem:[%s263 + $0x20] sm:$0xff]
      %v269 = vld [vmem:[%s263 + $0x28] sm:$0xff]
      %v270 = vld [vmem:[%s263 + $0x30] sm:$0xff]
      %v271 = vld [vmem:[%s263 + $0x38] sm:$0xff]
      %v272 = vld [vmem:[%s263 + $0x40] sm:$0xff]
      %v273 = vld [vmem:[%s263 + $0x48] sm:$0xff]
      %v274 = vld [vmem:[%s263 + $0x50] sm:$0xff]
      %v275 = vld [vmem:[%s263 + $0x58] sm:$0xff]
      %v276 = vld [vmem:[%s263 + $0x60] sm:$0xff]
      %v277 = vld [vmem:[%s263 + $0x68] sm:$0xff]
      %v278 = vld [vmem:[%s263 + $0x70] sm:$0xff]
      %v279 = vld [vmem:[%s263 + $0x78] sm:$0xff]
      %v280 = vld [vmem:[%s263 + $0x80] sm:$0xff]
      %v281 = vld [vmem:[%s263 + $0x88] sm:$0xff]
      %v282 = vld [vmem:[%s263 + $0x90] sm:$0xff]
      %v283 = vld [vmem:[%s263 + $0x98] sm:$0xff]
      %v284 = vld [vmem:[%s263 + $0xa0] sm:$0xff]
      %v285 = vld [vmem:[%s263 + $0xa8] sm:$0xff]
      %v286 = vld [vmem:[%s263 + $0xb0] sm:$0xff]
      %v287 = vld [vmem:[%s263 + $0xb8] sm:$0xff]
      %v288 = vld [vmem:[%s263 + $0xc0] sm:$0xff]
      %v289 = vld [vmem:[%s263 + $0xc8] sm:$0xff]
      %v290 = vld [vmem:[%s263 + $0xd0] sm:$0xff]
      %v291 = vld [vmem:[%s263 + $0xd8] sm:$0xff]
      %v292 = vld [vmem:[%s263 + $0xe0] sm:$0xff]
      %v293 = vld [vmem:[%s263 + $0xe8] sm:$0xff]
      %v294 = vld [vmem:[%s263 + $0xf0] sm:$0xff]
      %v295 = vld [vmem:[%s263 + $0xf8] sm:$0xff]
      %v296 = vld [vmem:[%s263 + $0x100] sm:$0xff]
      %v297 = vld [vmem:[%s263 + $0x108] sm:$0xff]
      %v298 = vld [vmem:[%s263 + $0x110] sm:$0xff]
      %v299 = vld [vmem:[%s263 + $0x118] sm:$0xff]
      %v300 = vld [vmem:[%s263 + $0x120] sm:$0xff]
      %v301 = vld [vmem:[%s263 + $0x128] sm:$0xff]
      %v302 = vld [vmem:[%s263 + $0x130] sm:$0xff]
      %v303 = vld [vmem:[%s263 + $0x138] sm:$0xff]
      %v304 = vld [vmem:[%s263 + $0x140] sm:$0xff]
      %v305 = vld [vmem:[%s263 + $0x148] sm:$0xff]
      %v307 = vlaneseq
      %v308 = vshrl.u32 %v307, 7
      %v309 = vsub.s32 0, %v308
      %v310 = vrot.slane %v260, %v309
      %v312 = vrot.slane %v264, 5
      %v313 = vrot.slane %v267, 5
      %v314 = vrot.slane %v270, 5
      %v315 = vrot.slane %v273, 5
      %v316 = vrot.slane %v276, 5
      %v317 = vrot.slane %v279, 5
      %v318 = vrot.slane %v282, 5
      %v319 = vrot.slane %v285, 5
      %v320 = vrot.slane %v288, 5
      %v321 = vrot.slane %v291, 5
      %v322 = vrot.slane %v294, 5
      %v323 = vrot.slane %v297, 5
      %v324 = vrot.slane %v300, 5
      %v325 = vrot.slane %v303, 5
      %v326 = vrot.slane %v265, 5
      %v327 = vrot.slane %v268, 5
      %v328 = vrot.slane %v271, 5
      %v329 = vrot.slane %v274, 5
      %v330 = vrot.slane %v277, 5
      %v331 = vrot.slane %v280, 5
      %v332 = vrot.slane %v283, 5
      %v333 = vrot.slane %v286, 5
      %v334 = vrot.slane %v289, 5
      %v335 = vrot.slane %v292, 5
      %v336 = vrot.slane %v295, 5
      %v337 = vrot.slane %v298, 5
      %v338 = vrot.slane %v301, 5
      %v339 = vrot.slane %v304, 5
      %v340 = vlaneseq
      %v341 = vshrl.u32 %v340, 7
      %vm342 = vcmp.lt.s32.totalorder %v341, 3
      %v343 = vsel %vm342, %v312, %v326
      %v344 = vsel %vm342, %v313, %v327
      %v345 = vsel %vm342, %v314, %v328
      %v346 = vsel %vm342, %v315, %v329
      %v347 = vsel %vm342, %v316, %v330
      %v348 = vsel %vm342, %v317, %v331
      %v349 = vsel %vm342, %v318, %v332
      %v350 = vsel %vm342, %v319, %v333
      %v351 = vsel %vm342, %v320, %v334
      %v352 = vsel %vm342, %v321, %v335
      %v353 = vsel %vm342, %v322, %v336
      %v354 = vsel %vm342, %v323, %v337
      %v355 = vsel %vm342, %v324, %v338
      %v356 = vsel %vm342, %v325, %v339
      %v357 = vlaneseq
      %v358 = vshrl.u32 %v357, 7
      %v359 = vsub.s32 0, %v358
      %v360 = vrot.slane %v253, %v359
      %v361 = vmul.f32 %v343, %v360
      %v362 = vmul.f32 %v344, %v360
      %v363 = vmul.f32 %v345, %v360
      %v364 = vmul.f32 %v346, %v360
      %v365 = vmul.f32 %v347, %v360
      %v366 = vmul.f32 %v348, %v360
      %v367 = vmul.f32 %v349, %v360
      %v368 = vmul.f32 %v350, %v360
      %v369 = vadd.f32 %v310, %v361
      %v370 = vadd.f32 %v310, %v362
      %v371 = vadd.f32 %v310, %v363
      %v372 = vadd.f32 %v310, %v364
      %v373 = vadd.f32 %v310, %v365
      %v374 = vadd.f32 %v310, %v366
      %v375 = vadd.f32 %v310, %v367
      %v376 = vadd.f32 %v310, %v368
      %v377 = vlaneseq
      %v378 = vshrl.u32 %v377, 7
      %v379 = vsub.s32 7, %v378
      %v380 = vrot.slane %v253, %v379
      %v381 = vmul.f32 %v344, %v380
      %v382 = vmul.f32 %v345, %v380
      %v383 = vmul.f32 %v346, %v380
      %v384 = vmul.f32 %v347, %v380
      %v385 = vmul.f32 %v348, %v380
      %v386 = vmul.f32 %v349, %v380
      %v387 = vmul.f32 %v350, %v380
      %v388 = vmul.f32 %v351, %v380
      %v389 = vadd.f32 %v369, %v381
      %v390 = vadd.f32 %v370, %v382
      %v391 = vadd.f32 %v371, %v383
      %v392 = vadd.f32 %v372, %v384
      %v393 = vadd.f32 %v373, %v385
      %v394 = vadd.f32 %v374, %v386
      %v395 = vadd.f32 %v375, %v387
      %v396 = vadd.f32 %v376, %v388
      %v397 = vlaneseq
      %v398 = vshrl.u32 %v397, 7
      %v399 = vsub.s32 6, %v398
      %v400 = vrot.slane %v254, %v399
      %v401 = vmul.f32 %v345, %v400
      %v402 = vmul.f32 %v346, %v400
      %v403 = vmul.f32 %v347, %v400
      %v404 = vmul.f32 %v348, %v400
      %v405 = vmul.f32 %v349, %v400
      %v406 = vmul.f32 %v350, %v400
      %v407 = vmul.f32 %v351, %v400
      %v408 = vmul.f32 %v352, %v400
      %v409 = vadd.f32 %v389, %v401
      %v410 = vadd.f32 %v390, %v402
      %v411 = vadd.f32 %v391, %v403
      %v412 = vadd.f32 %v392, %v404
      %v413 = vadd.f32 %v393, %v405
      %v414 = vadd.f32 %v394, %v406
      %v415 = vadd.f32 %v395, %v407
      %v416 = vadd.f32 %v396, %v408
      %v417 = vlaneseq
      %v418 = vshrl.u32 %v417, 7
      %v419 = vsub.s32 5, %v418
      %v420 = vrot.slane %v255, %v419
      %v421 = vmul.f32 %v346, %v420
      %v422 = vmul.f32 %v347, %v420
      %v423 = vmul.f32 %v348, %v420
      %v424 = vmul.f32 %v349, %v420
      %v425 = vmul.f32 %v350, %v420
      %v426 = vmul.f32 %v351, %v420
      %v427 = vmul.f32 %v352, %v420
      %v428 = vmul.f32 %v353, %v420
      %v429 = vadd.f32 %v409, %v421
      %v430 = vadd.f32 %v410, %v422
      %v431 = vadd.f32 %v411, %v423
      %v432 = vadd.f32 %v412, %v424
      %v433 = vadd.f32 %v413, %v425
      %v434 = vadd.f32 %v414, %v426
      %v435 = vadd.f32 %v415, %v427
      %v436 = vadd.f32 %v416, %v428
      %v437 = vlaneseq
      %v438 = vshrl.u32 %v437, 7
      %v439 = vsub.s32 4, %v438
      %v440 = vrot.slane %v256, %v439
      %v441 = vmul.f32 %v347, %v440
      %v442 = vmul.f32 %v348, %v440
      %v443 = vmul.f32 %v349, %v440
      %v444 = vmul.f32 %v350, %v440
      %v445 = vmul.f32 %v351, %v440
      %v446 = vmul.f32 %v352, %v440
      %v447 = vmul.f32 %v353, %v440
      %v448 = vmul.f32 %v354, %v440
      %v449 = vadd.f32 %v429, %v441
      %v450 = vadd.f32 %v430, %v442
      %v451 = vadd.f32 %v431, %v443
      %v452 = vadd.f32 %v432, %v444
      %v453 = vadd.f32 %v433, %v445
      %v454 = vadd.f32 %v434, %v446
      %v455 = vadd.f32 %v435, %v447
      %v456 = vadd.f32 %v436, %v448
      %v457 = vlaneseq
      %v458 = vshrl.u32 %v457, 7
      %v459 = vsub.s32 3, %v458
      %v460 = vrot.slane %v257, %v459
      %v461 = vmul.f32 %v348, %v460
      %v462 = vmul.f32 %v349, %v460
      %v463 = vmul.f32 %v350, %v460
      %v464 = vmul.f32 %v351, %v460
      %v465 = vmul.f32 %v352, %v460
      %v466 = vmul.f32 %v353, %v460
      %v467 = vmul.f32 %v354, %v460
      %v468 = vmul.f32 %v355, %v460
      %v469 = vadd.f32 %v449, %v461
      %v470 = vadd.f32 %v450, %v462
      %v471 = vadd.f32 %v451, %v463
      %v472 = vadd.f32 %v452, %v464
      %v473 = vadd.f32 %v453, %v465
      %v474 = vadd.f32 %v454, %v466
      %v475 = vadd.f32 %v455, %v467
      %v476 = vadd.f32 %v456, %v468
      %v477 = vlaneseq
      %v478 = vshrl.u32 %v477, 7
      %v479 = vsub.s32 2, %v478
      %v480 = vrot.slane %v258, %v479
      %v481 = vmul.f32 %v349, %v480
      %v482 = vmul.f32 %v350, %v480
      %v483 = vmul.f32 %v351, %v480
      %v484 = vmul.f32 %v352, %v480
      %v485 = vmul.f32 %v353, %v480
      %v486 = vmul.f32 %v354, %v480
      %v487 = vmul.f32 %v355, %v480
      %v488 = vmul.f32 %v356, %v480
      %v489 = vadd.f32 %v469, %v481
      %v490 = vadd.f32 %v470, %v482
      %v491 = vadd.f32 %v471, %v483
      %v492 = vadd.f32 %v472, %v484
      %v493 = vadd.f32 %v473, %v485
      %v494 = vadd.f32 %v474, %v486
      %v495 = vadd.f32 %v475, %v487
      %v496 = vadd.f32 %v476, %v488
      %v497 = vrot.slane %v264, 6
      %v498 = vrot.slane %v267, 6
      %v499 = vrot.slane %v270, 6
      %v500 = vrot.slane %v273, 6
      %v501 = vrot.slane %v276, 6
      %v502 = vrot.slane %v279, 6
      %v503 = vrot.slane %v282, 6
      %v504 = vrot.slane %v285, 6
      %v505 = vrot.slane %v288, 6
      %v506 = vrot.slane %v291, 6
      %v507 = vrot.slane %v294, 6
      %v508 = vrot.slane %v297, 6
      %v509 = vrot.slane %v300, 6
      %v510 = vrot.slane %v303, 6
      %v511 = vrot.slane %v265, 6
      %v512 = vrot.slane %v268, 6
      %v513 = vrot.slane %v271, 6
      %v514 = vrot.slane %v274, 6
      %v515 = vrot.slane %v277, 6
      %v516 = vrot.slane %v280, 6
      %v517 = vrot.slane %v283, 6
      %v518 = vrot.slane %v286, 6
      %v519 = vrot.slane %v289, 6
      %v520 = vrot.slane %v292, 6
      %v521 = vrot.slane %v295, 6
      %v522 = vrot.slane %v298, 6
      %v523 = vrot.slane %v301, 6
      %v524 = vrot.slane %v304, 6
      %vm525 = vcmp.lt.s32.totalorder %v341, 2
      %v526 = vsel %vm525, %v497, %v511
      %v527 = vsel %vm525, %v498, %v512
      %v528 = vsel %vm525, %v499, %v513
      %v529 = vsel %vm525, %v500, %v514
      %v530 = vsel %vm525, %v501, %v515
      %v531 = vsel %vm525, %v502, %v516
      %v532 = vsel %vm525, %v503, %v517
      %v533 = vsel %vm525, %v504, %v518
      %v534 = vsel %vm525, %v505, %v519
      %v535 = vsel %vm525, %v506, %v520
      %v536 = vsel %vm525, %v507, %v521
      %v537 = vsel %vm525, %v508, %v522
      %v538 = vsel %vm525, %v509, %v523
      %v539 = vsel %vm525, %v510, %v524
      %v540 = vlaneseq
      %v541 = vshrl.u32 %v540, 7
      %v542 = vsub.s32 1, %v541
      %v543 = vrot.slane %v253, %v542
      %v544 = vmul.f32 %v526, %v543
      %v545 = vmul.f32 %v527, %v543
      %v546 = vmul.f32 %v528, %v543
      %v547 = vmul.f32 %v529, %v543
      %v548 = vmul.f32 %v530, %v543
      %v549 = vmul.f32 %v531, %v543
      %v550 = vmul.f32 %v532, %v543
      %v551 = vmul.f32 %v533, %v543
      %v552 = vadd.f32 %v489, %v544
      %v553 = vadd.f32 %v490, %v545
      %v554 = vadd.f32 %v491, %v546
      %v555 = vadd.f32 %v492, %v547
      %v556 = vadd.f32 %v493, %v548
      %v557 = vadd.f32 %v494, %v549
      %v558 = vadd.f32 %v495, %v550
      %v559 = vadd.f32 %v496, %v551
      %v560 = vlaneseq
      %v561 = vshrl.u32 %v560, 7
      %v562 = vsub.s32 0, %v561
      %v563 = vrot.slane %v254, %v562
      %v564 = vmul.f32 %v527, %v563
      %v565 = vmul.f32 %v528, %v563
      %v566 = vmul.f32 %v529, %v563
      %v567 = vmul.f32 %v530, %v563
      %v568 = vmul.f32 %v531, %v563
      %v569 = vmul.f32 %v532, %v563
      %v570 = vmul.f32 %v533, %v563
      %v571 = vmul.f32 %v534, %v563
      %v572 = vadd.f32 %v552, %v564
      %v573 = vadd.f32 %v553, %v565
      %v574 = vadd.f32 %v554, %v566
      %v575 = vadd.f32 %v555, %v567
      %v576 = vadd.f32 %v556, %v568
      %v577 = vadd.f32 %v557, %v569
      %v578 = vadd.f32 %v558, %v570
      %v579 = vadd.f32 %v559, %v571
      %v580 = vlaneseq
      %v581 = vshrl.u32 %v580, 7
      %v582 = vsub.s32 7, %v581
      %v583 = vrot.slane %v254, %v582
      %v584 = vmul.f32 %v528, %v583
      %v585 = vmul.f32 %v529, %v583
      %v586 = vmul.f32 %v530, %v583
      %v587 = vmul.f32 %v531, %v583
      %v588 = vmul.f32 %v532, %v583
      %v589 = vmul.f32 %v533, %v583
      %v590 = vmul.f32 %v534, %v583
      %v591 = vmul.f32 %v535, %v583
      %v592 = vadd.f32 %v572, %v584
      %v593 = vadd.f32 %v573, %v585
      %v594 = vadd.f32 %v574, %v586
      %v595 = vadd.f32 %v575, %v587
      %v596 = vadd.f32 %v576, %v588
      %v597 = vadd.f32 %v577, %v589
      %v598 = vadd.f32 %v578, %v590
      %v599 = vadd.f32 %v579, %v591
      %v600 = vlaneseq
      %v601 = vshrl.u32 %v600, 7
      %v602 = vsub.s32 6, %v601
      %v603 = vrot.slane %v255, %v602
      %v604 = vmul.f32 %v529, %v603
      %v605 = vmul.f32 %v530, %v603
      %v606 = vmul.f32 %v531, %v603
      %v607 = vmul.f32 %v532, %v603
      %v608 = vmul.f32 %v533, %v603
      %v609 = vmul.f32 %v534, %v603
      %v610 = vmul.f32 %v535, %v603
      %v611 = vmul.f32 %v536, %v603
      %v612 = vadd.f32 %v592, %v604
      %v613 = vadd.f32 %v593, %v605
      %v614 = vadd.f32 %v594, %v606
      %v615 = vadd.f32 %v595, %v607
      %v616 = vadd.f32 %v596, %v608
      %v617 = vadd.f32 %v597, %v609
      %v618 = vadd.f32 %v598, %v610
      %v619 = vadd.f32 %v599, %v611
      %v620 = vlaneseq
      %v621 = vshrl.u32 %v620, 7
      %v622 = vsub.s32 5, %v621
      %v623 = vrot.slane %v256, %v622
      %v624 = vmul.f32 %v530, %v623
      %v625 = vmul.f32 %v531, %v623
      %v626 = vmul.f32 %v532, %v623
      %v627 = vmul.f32 %v533, %v623
      %v628 = vmul.f32 %v534, %v623
      %v629 = vmul.f32 %v535, %v623
      %v630 = vmul.f32 %v536, %v623
      %v631 = vmul.f32 %v537, %v623
      %v632 = vadd.f32 %v612, %v624
      %v633 = vadd.f32 %v613, %v625
      %v634 = vadd.f32 %v614, %v626
      %v635 = vadd.f32 %v615, %v627
      %v636 = vadd.f32 %v616, %v628
      %v637 = vadd.f32 %v617, %v629
      %v638 = vadd.f32 %v618, %v630
      %v639 = vadd.f32 %v619, %v631
      %v640 = vlaneseq
      %v641 = vshrl.u32 %v640, 7
      %v642 = vsub.s32 4, %v641
      %v643 = vrot.slane %v257, %v642
      %v644 = vmul.f32 %v531, %v643
      %v645 = vmul.f32 %v532, %v643
      %v646 = vmul.f32 %v533, %v643
      %v647 = vmul.f32 %v534, %v643
      %v648 = vmul.f32 %v535, %v643
      %v649 = vmul.f32 %v536, %v643
      %v650 = vmul.f32 %v537, %v643
      %v651 = vmul.f32 %v538, %v643
      %v652 = vadd.f32 %v632, %v644
      %v653 = vadd.f32 %v633, %v645
      %v654 = vadd.f32 %v634, %v646
      %v655 = vadd.f32 %v635, %v647
      %v656 = vadd.f32 %v636, %v648
      %v657 = vadd.f32 %v637, %v649
      %v658 = vadd.f32 %v638, %v650
      %v659 = vadd.f32 %v639, %v651
      %v660 = vlaneseq
      %v661 = vshrl.u32 %v660, 7
      %v662 = vsub.s32 3, %v661
      %v663 = vrot.slane %v258, %v662
      %v664 = vmul.f32 %v532, %v663
      %v665 = vmul.f32 %v533, %v663
      %v666 = vmul.f32 %v534, %v663
      %v667 = vmul.f32 %v535, %v663
      %v668 = vmul.f32 %v536, %v663
      %v669 = vmul.f32 %v537, %v663
      %v670 = vmul.f32 %v538, %v663
      %v671 = vmul.f32 %v539, %v663
      %v672 = vadd.f32 %v652, %v664
      %v673 = vadd.f32 %v653, %v665
      %v674 = vadd.f32 %v654, %v666
      %v675 = vadd.f32 %v655, %v667
      %v676 = vadd.f32 %v656, %v668
      %v677 = vadd.f32 %v657, %v669
      %v678 = vadd.f32 %v658, %v670
      %v679 = vadd.f32 %v659, %v671
      %v680 = vrot.slane %v264, 7
      %v681 = vrot.slane %v267, 7
      %v682 = vrot.slane %v270, 7
      %v683 = vrot.slane %v273, 7
      %v684 = vrot.slane %v276, 7
      %v685 = vrot.slane %v279, 7
      %v686 = vrot.slane %v282, 7
      %v687 = vrot.slane %v285, 7
      %v688 = vrot.slane %v288, 7
      %v689 = vrot.slane %v291, 7
      %v690 = vrot.slane %v294, 7
      %v691 = vrot.slane %v297, 7
      %v692 = vrot.slane %v300, 7
      %v693 = vrot.slane %v303, 7
      %v694 = vrot.slane %v265, 7
      %v695 = vrot.slane %v268, 7
      %v696 = vrot.slane %v271, 7
      %v697 = vrot.slane %v274, 7
      %v698 = vrot.slane %v277, 7
      %v699 = vrot.slane %v280, 7
      %v700 = vrot.slane %v283, 7
      %v701 = vrot.slane %v286, 7
      %v702 = vrot.slane %v289, 7
      %v703 = vrot.slane %v292, 7
      %v704 = vrot.slane %v295, 7
      %v705 = vrot.slane %v298, 7
      %v706 = vrot.slane %v301, 7
      %v707 = vrot.slane %v304, 7
      %vm708 = vcmp.lt.s32.totalorder %v341, 1
      %v709 = vsel %vm708, %v680, %v694
      %v710 = vsel %vm708, %v681, %v695
      %v711 = vsel %vm708, %v682, %v696
      %v712 = vsel %vm708, %v683, %v697
      %v713 = vsel %vm708, %v684, %v698
      %v714 = vsel %vm708, %v685, %v699
      %v715 = vsel %vm708, %v686, %v700
      %v716 = vsel %vm708, %v687, %v701
      %v717 = vsel %vm708, %v688, %v702
      %v718 = vsel %vm708, %v689, %v703
      %v719 = vsel %vm708, %v690, %v704
      %v720 = vsel %vm708, %v691, %v705
      %v721 = vsel %vm708, %v692, %v706
      %v722 = vsel %vm708, %v693, %v707
      %v723 = vlaneseq
      %v724 = vshrl.u32 %v723, 7
      %v725 = vsub.s32 2, %v724
      %v726 = vrot.slane %v253, %v725
      %v727 = vmul.f32 %v709, %v726
      %v728 = vmul.f32 %v710, %v726
      %v729 = vmul.f32 %v711, %v726
      %v730 = vmul.f32 %v712, %v726
      %v731 = vmul.f32 %v713, %v726
      %v732 = vmul.f32 %v714, %v726
      %v733 = vmul.f32 %v715, %v726
      %v734 = vmul.f32 %v716, %v726
      %v735 = vadd.f32 %v672, %v727
      %v736 = vadd.f32 %v673, %v728
      %v737 = vadd.f32 %v674, %v729
      %v738 = vadd.f32 %v675, %v730
      %v739 = vadd.f32 %v676, %v731
      %v740 = vadd.f32 %v677, %v732
      %v741 = vadd.f32 %v678, %v733
      %v742 = vadd.f32 %v679, %v734
      %v743 = vlaneseq
      %v744 = vshrl.u32 %v743, 7
      %v745 = vsub.s32 1, %v744
      %v746 = vrot.slane %v254, %v745
      %v747 = vmul.f32 %v710, %v746
      %v748 = vmul.f32 %v711, %v746
      %v749 = vmul.f32 %v712, %v746
      %v750 = vmul.f32 %v713, %v746
      %v751 = vmul.f32 %v714, %v746
      %v752 = vmul.f32 %v715, %v746
      %v753 = vmul.f32 %v716, %v746
      %v754 = vmul.f32 %v717, %v746
      %v755 = vadd.f32 %v735, %v747
      %v756 = vadd.f32 %v736, %v748
      %v757 = vadd.f32 %v737, %v749
      %v758 = vadd.f32 %v738, %v750
      %v759 = vadd.f32 %v739, %v751
      %v760 = vadd.f32 %v740, %v752
      %v761 = vadd.f32 %v741, %v753
      %v762 = vadd.f32 %v742, %v754
      %v763 = vlaneseq
      %v764 = vshrl.u32 %v763, 7
      %v765 = vsub.s32 0, %v764
      %v766 = vrot.slane %v255, %v765
      %v767 = vmul.f32 %v711, %v766
      %v768 = vmul.f32 %v712, %v766
      %v769 = vmul.f32 %v713, %v766
      %v770 = vmul.f32 %v714, %v766
      %v771 = vmul.f32 %v715, %v766
      %v772 = vmul.f32 %v716, %v766
      %v773 = vmul.f32 %v717, %v766
      %v774 = vmul.f32 %v718, %v766
      %v775 = vadd.f32 %v755, %v767
      %v776 = vadd.f32 %v756, %v768
      %v777 = vadd.f32 %v757, %v769
      %v778 = vadd.f32 %v758, %v770
      %v779 = vadd.f32 %v759, %v771
      %v780 = vadd.f32 %v760, %v772
      %v781 = vadd.f32 %v761, %v773
      %v782 = vadd.f32 %v762, %v774
      %v783 = vlaneseq
      %v784 = vshrl.u32 %v783, 7
      %v785 = vsub.s32 7, %v784
      %v786 = vrot.slane %v255, %v785
      %v787 = vmul.f32 %v712, %v786
      %v788 = vmul.f32 %v713, %v786
      %v789 = vmul.f32 %v714, %v786
      %v790 = vmul.f32 %v715, %v786
      %v791 = vmul.f32 %v716, %v786
      %v792 = vmul.f32 %v717, %v786
      %v793 = vmul.f32 %v718, %v786
      %v794 = vmul.f32 %v719, %v786
      %v795 = vadd.f32 %v775, %v787
      %v796 = vadd.f32 %v776, %v788
      %v797 = vadd.f32 %v777, %v789
      %v798 = vadd.f32 %v778, %v790
      %v799 = vadd.f32 %v779, %v791
      %v800 = vadd.f32 %v780, %v792
      %v801 = vadd.f32 %v781, %v793
      %v802 = vadd.f32 %v782, %v794
      %v803 = vlaneseq
      %v804 = vshrl.u32 %v803, 7
      %v805 = vsub.s32 6, %v804
      %v806 = vrot.slane %v256, %v805
      %v807 = vmul.f32 %v713, %v806
      %v808 = vmul.f32 %v714, %v806
      %v809 = vmul.f32 %v715, %v806
      %v810 = vmul.f32 %v716, %v806
      %v811 = vmul.f32 %v717, %v806
      %v812 = vmul.f32 %v718, %v806
      %v813 = vmul.f32 %v719, %v806
      %v814 = vmul.f32 %v720, %v806
      %v815 = vadd.f32 %v795, %v807
      %v816 = vadd.f32 %v796, %v808
      %v817 = vadd.f32 %v797, %v809
      %v818 = vadd.f32 %v798, %v810
      %v819 = vadd.f32 %v799, %v811
      %v820 = vadd.f32 %v800, %v812
      %v821 = vadd.f32 %v801, %v813
      %v822 = vadd.f32 %v802, %v814
      %v823 = vlaneseq
      %v824 = vshrl.u32 %v823, 7
      %v825 = vsub.s32 5, %v824
      %v826 = vrot.slane %v257, %v825
      %v827 = vmul.f32 %v714, %v826
      %v828 = vmul.f32 %v715, %v826
      %v829 = vmul.f32 %v716, %v826
      %v830 = vmul.f32 %v717, %v826
      %v831 = vmul.f32 %v718, %v826
      %v832 = vmul.f32 %v719, %v826
      %v833 = vmul.f32 %v720, %v826
      %v834 = vmul.f32 %v721, %v826
      %v835 = vadd.f32 %v815, %v827
      %v836 = vadd.f32 %v816, %v828
      %v837 = vadd.f32 %v817, %v829
      %v838 = vadd.f32 %v818, %v830
      %v839 = vadd.f32 %v819, %v831
      %v840 = vadd.f32 %v820, %v832
      %v841 = vadd.f32 %v821, %v833
      %v842 = vadd.f32 %v822, %v834
      %v843 = vlaneseq
      %v844 = vshrl.u32 %v843, 7
      %v845 = vsub.s32 4, %v844
      %v846 = vrot.slane %v258, %v845
      %v847 = vmul.f32 %v715, %v846
      %v848 = vmul.f32 %v716, %v846
      %v849 = vmul.f32 %v717, %v846
      %v850 = vmul.f32 %v718, %v846
      %v851 = vmul.f32 %v719, %v846
      %v852 = vmul.f32 %v720, %v846
      %v853 = vmul.f32 %v721, %v846
      %v854 = vmul.f32 %v722, %v846
      %v855 = vadd.f32 %v835, %v847
      %v856 = vadd.f32 %v836, %v848
      %v857 = vadd.f32 %v837, %v849
      %v858 = vadd.f32 %v838, %v850
      %v859 = vadd.f32 %v839, %v851
      %v860 = vadd.f32 %v840, %v852
      %v861 = vadd.f32 %v841, %v853
      %v862 = vadd.f32 %v842, %v854
      %v863 = vlaneseq
      %v864 = vshrl.u32 %v863, 7
      %v865 = vsub.s32 3, %v864
      %v866 = vrot.slane %v253, %v865
      %v867 = vmul.f32 %v265, %v866
      %v868 = vmul.f32 %v268, %v866
      %v869 = vmul.f32 %v271, %v866
      %v870 = vmul.f32 %v274, %v866
      %v871 = vmul.f32 %v277, %v866
      %v872 = vmul.f32 %v280, %v866
      %v873 = vmul.f32 %v283, %v866
      %v874 = vmul.f32 %v286, %v866
      %v875 = vadd.f32 %v855, %v867
      %v876 = vadd.f32 %v856, %v868
      %v877 = vadd.f32 %v857, %v869
      %v878 = vadd.f32 %v858, %v870
      %v879 = vadd.f32 %v859, %v871
      %v880 = vadd.f32 %v860, %v872
      %v881 = vadd.f32 %v861, %v873
      %v882 = vadd.f32 %v862, %v874
      %v883 = vlaneseq
      %v884 = vshrl.u32 %v883, 7
      %v885 = vsub.s32 2, %v884
      %v886 = vrot.slane %v254, %v885
      %v887 = vmul.f32 %v268, %v886
      %v888 = vmul.f32 %v271, %v886
      %v889 = vmul.f32 %v274, %v886
      %v890 = vmul.f32 %v277, %v886
      %v891 = vmul.f32 %v280, %v886
      %v892 = vmul.f32 %v283, %v886
      %v893 = vmul.f32 %v286, %v886
      %v894 = vmul.f32 %v289, %v886
      %v895 = vadd.f32 %v875, %v887
      %v896 = vadd.f32 %v876, %v888
      %v897 = vadd.f32 %v877, %v889
      %v898 = vadd.f32 %v878, %v890
      %v899 = vadd.f32 %v879, %v891
      %v900 = vadd.f32 %v880, %v892
      %v901 = vadd.f32 %v881, %v893
      %v902 = vadd.f32 %v882, %v894
      %v903 = vlaneseq
      %v904 = vshrl.u32 %v903, 7
      %v905 = vsub.s32 1, %v904
      %v906 = vrot.slane %v255, %v905
      %v907 = vmul.f32 %v271, %v906
      %v908 = vmul.f32 %v274, %v906
      %v909 = vmul.f32 %v277, %v906
      %v910 = vmul.f32 %v280, %v906
      %v911 = vmul.f32 %v283, %v906
      %v912 = vmul.f32 %v286, %v906
      %v913 = vmul.f32 %v289, %v906
      %v914 = vmul.f32 %v292, %v906
      %v915 = vadd.f32 %v895, %v907
      %v916 = vadd.f32 %v896, %v908
      %v917 = vadd.f32 %v897, %v909
      %v918 = vadd.f32 %v898, %v910
      %v919 = vadd.f32 %v899, %v911
      %v920 = vadd.f32 %v900, %v912
      %v921 = vadd.f32 %v901, %v913
      %v922 = vadd.f32 %v902, %v914
      %v923 = vlaneseq
      %v924 = vshrl.u32 %v923, 7
      %v925 = vsub.s32 0, %v924
      %v926 = vrot.slane %v256, %v925
      %v927 = vmul.f32 %v274, %v926
      %v928 = vmul.f32 %v277, %v926
      %v929 = vmul.f32 %v280, %v926
      %v930 = vmul.f32 %v283, %v926
      %v931 = vmul.f32 %v286, %v926
      %v932 = vmul.f32 %v289, %v926
      %v933 = vmul.f32 %v292, %v926
      %v934 = vmul.f32 %v295, %v926
      %v935 = vadd.f32 %v915, %v927
      %v936 = vadd.f32 %v916, %v928
      %v937 = vadd.f32 %v917, %v929
      %v938 = vadd.f32 %v918, %v930
      %v939 = vadd.f32 %v919, %v931
      %v940 = vadd.f32 %v920, %v932
      %v941 = vadd.f32 %v921, %v933
      %v942 = vadd.f32 %v922, %v934
      %v943 = vlaneseq
      %v944 = vshrl.u32 %v943, 7
      %v945 = vsub.s32 7, %v944
      %v946 = vrot.slane %v256, %v945
      %v947 = vmul.f32 %v277, %v946
      %v948 = vmul.f32 %v280, %v946
      %v949 = vmul.f32 %v283, %v946
      %v950 = vmul.f32 %v286, %v946
      %v951 = vmul.f32 %v289, %v946
      %v952 = vmul.f32 %v292, %v946
      %v953 = vmul.f32 %v295, %v946
      %v954 = vmul.f32 %v298, %v946
      %v955 = vadd.f32 %v935, %v947
      %v956 = vadd.f32 %v936, %v948
      %v957 = vadd.f32 %v937, %v949
      %v958 = vadd.f32 %v938, %v950
      %v959 = vadd.f32 %v939, %v951
      %v960 = vadd.f32 %v940, %v952
      %v961 = vadd.f32 %v941, %v953
      %v962 = vadd.f32 %v942, %v954
      %v963 = vlaneseq
      %v964 = vshrl.u32 %v963, 7
      %v965 = vsub.s32 6, %v964
      %v966 = vrot.slane %v257, %v965
      %v967 = vmul.f32 %v280, %v966
      %v968 = vmul.f32 %v283, %v966
      %v969 = vmul.f32 %v286, %v966
      %v970 = vmul.f32 %v289, %v966
      %v971 = vmul.f32 %v292, %v966
      %v972 = vmul.f32 %v295, %v966
      %v973 = vmul.f32 %v298, %v966
      %v974 = vmul.f32 %v301, %v966
      %v975 = vadd.f32 %v955, %v967
      %v976 = vadd.f32 %v956, %v968
      %v977 = vadd.f32 %v957, %v969
      %v978 = vadd.f32 %v958, %v970
      %v979 = vadd.f32 %v959, %v971
      %v980 = vadd.f32 %v960, %v972
      %v981 = vadd.f32 %v961, %v973
      %v982 = vadd.f32 %v962, %v974
      %v983 = vlaneseq
      %v984 = vshrl.u32 %v983, 7
      %v985 = vsub.s32 5, %v984
      %v986 = vrot.slane %v258, %v985
      %v987 = vmul.f32 %v283, %v986
      %v988 = vmul.f32 %v286, %v986
      %v989 = vmul.f32 %v289, %v986
      %v990 = vmul.f32 %v292, %v986
      %v991 = vmul.f32 %v295, %v986
      %v992 = vmul.f32 %v298, %v986
      %v993 = vmul.f32 %v301, %v986
      %v994 = vmul.f32 %v304, %v986
      %v995 = vadd.f32 %v975, %v987
      %v996 = vadd.f32 %v976, %v988
      %v997 = vadd.f32 %v977, %v989
      %v998 = vadd.f32 %v978, %v990
      %v999 = vadd.f32 %v979, %v991
      %v1000 = vadd.f32 %v980, %v992
      %v1001 = vadd.f32 %v981, %v993
      %v1002 = vadd.f32 %v982, %v994
      %v1003 = vrot.slane %v265, 1
      %v1004 = vrot.slane %v268, 1
      %v1005 = vrot.slane %v271, 1
      %v1006 = vrot.slane %v274, 1
      %v1007 = vrot.slane %v277, 1
      %v1008 = vrot.slane %v280, 1
      %v1009 = vrot.slane %v283, 1
      %v1010 = vrot.slane %v286, 1
      %v1011 = vrot.slane %v289, 1
      %v1012 = vrot.slane %v292, 1
      %v1013 = vrot.slane %v295, 1
      %v1014 = vrot.slane %v298, 1
      %v1015 = vrot.slane %v301, 1
      %v1016 = vrot.slane %v304, 1
      %v1017 = vrot.slane %v266, 1
      %v1018 = vrot.slane %v269, 1
      %v1019 = vrot.slane %v272, 1
      %v1020 = vrot.slane %v275, 1
      %v1021 = vrot.slane %v278, 1
      %v1022 = vrot.slane %v281, 1
      %v1023 = vrot.slane %v284, 1
      %v1024 = vrot.slane %v287, 1
      %v1025 = vrot.slane %v290, 1
      %v1026 = vrot.slane %v293, 1
      %v1027 = vrot.slane %v296, 1
      %v1028 = vrot.slane %v299, 1
      %v1029 = vrot.slane %v302, 1
      %v1030 = vrot.slane %v305, 1
      %vm1031 = vcmp.lt.s32.totalorder %v341, 7
      %v1032 = vsel %vm1031, %v1003, %v1017
      %v1033 = vsel %vm1031, %v1004, %v1018
      %v1034 = vsel %vm1031, %v1005, %v1019
      %v1035 = vsel %vm1031, %v1006, %v1020
      %v1036 = vsel %vm1031, %v1007, %v1021
      %v1037 = vsel %vm1031, %v1008, %v1022
      %v1038 = vsel %vm1031, %v1009, %v1023
      %v1039 = vsel %vm1031, %v1010, %v1024
      %v1040 = vsel %vm1031, %v1011, %v1025
      %v1041 = vsel %vm1031, %v1012, %v1026
      %v1042 = vsel %vm1031, %v1013, %v1027
      %v1043 = vsel %vm1031, %v1014, %v1028
      %v1044 = vsel %vm1031, %v1015, %v1029
      %v1045 = vsel %vm1031, %v1016, %v1030
      %v1046 = vlaneseq
      %v1047 = vshrl.u32 %v1046, 7
      %v1048 = vsub.s32 4, %v1047
      %v1049 = vrot.slane %v253, %v1048
      %v1050 = vmul.f32 %v1032, %v1049
      %v1051 = vmul.f32 %v1033, %v1049
      %v1052 = vmul.f32 %v1034, %v1049
      %v1053 = vmul.f32 %v1035, %v1049
      %v1054 = vmul.f32 %v1036, %v1049
      %v1055 = vmul.f32 %v1037, %v1049
      %v1056 = vmul.f32 %v1038, %v1049
      %v1057 = vmul.f32 %v1039, %v1049
      %v1058 = vadd.f32 %v995, %v1050
      %v1059 = vadd.f32 %v996, %v1051
      %v1060 = vadd.f32 %v997, %v1052
      %v1061 = vadd.f32 %v998, %v1053
      %v1062 = vadd.f32 %v999, %v1054
      %v1063 = vadd.f32 %v1000, %v1055
      %v1064 = vadd.f32 %v1001, %v1056
      %v1065 = vadd.f32 %v1002, %v1057
      %v1066 = vlaneseq
      %v1067 = vshrl.u32 %v1066, 7
      %v1068 = vsub.s32 3, %v1067
      %v1069 = vrot.slane %v254, %v1068
      %v1070 = vmul.f32 %v1033, %v1069
      %v1071 = vmul.f32 %v1034, %v1069
      %v1072 = vmul.f32 %v1035, %v1069
      %v1073 = vmul.f32 %v1036, %v1069
      %v1074 = vmul.f32 %v1037, %v1069
      %v1075 = vmul.f32 %v1038, %v1069
      %v1076 = vmul.f32 %v1039, %v1069
      %v1077 = vmul.f32 %v1040, %v1069
      %v1078 = vadd.f32 %v1058, %v1070
      %v1079 = vadd.f32 %v1059, %v1071
      %v1080 = vadd.f32 %v1060, %v1072
      %v1081 = vadd.f32 %v1061, %v1073
      %v1082 = vadd.f32 %v1062, %v1074
      %v1083 = vadd.f32 %v1063, %v1075
      %v1084 = vadd.f32 %v1064, %v1076
      %v1085 = vadd.f32 %v1065, %v1077
      %v1086 = vlaneseq
      %v1087 = vshrl.u32 %v1086, 7
      %v1088 = vsub.s32 2, %v1087
      %v1089 = vrot.slane %v255, %v1088
      %v1090 = vmul.f32 %v1034, %v1089
      %v1091 = vmul.f32 %v1035, %v1089
      %v1092 = vmul.f32 %v1036, %v1089
      %v1093 = vmul.f32 %v1037, %v1089
      %v1094 = vmul.f32 %v1038, %v1089
      %v1095 = vmul.f32 %v1039, %v1089
      %v1096 = vmul.f32 %v1040, %v1089
      %v1097 = vmul.f32 %v1041, %v1089
      %v1098 = vadd.f32 %v1078, %v1090
      %v1099 = vadd.f32 %v1079, %v1091
      %v1100 = vadd.f32 %v1080, %v1092
      %v1101 = vadd.f32 %v1081, %v1093
      %v1102 = vadd.f32 %v1082, %v1094
      %v1103 = vadd.f32 %v1083, %v1095
      %v1104 = vadd.f32 %v1084, %v1096
      %v1105 = vadd.f32 %v1085, %v1097
      %v1106 = vlaneseq
      %v1107 = vshrl.u32 %v1106, 7
      %v1108 = vsub.s32 1, %v1107
      %v1109 = vrot.slane %v256, %v1108
      %v1110 = vmul.f32 %v1035, %v1109
      %v1111 = vmul.f32 %v1036, %v1109
      %v1112 = vmul.f32 %v1037, %v1109
      %v1113 = vmul.f32 %v1038, %v1109
      %v1114 = vmul.f32 %v1039, %v1109
      %v1115 = vmul.f32 %v1040, %v1109
      %v1116 = vmul.f32 %v1041, %v1109
      %v1117 = vmul.f32 %v1042, %v1109
      %v1118 = vadd.f32 %v1098, %v1110
      %v1119 = vadd.f32 %v1099, %v1111
      %v1120 = vadd.f32 %v1100, %v1112
      %v1121 = vadd.f32 %v1101, %v1113
      %v1122 = vadd.f32 %v1102, %v1114
      %v1123 = vadd.f32 %v1103, %v1115
      %v1124 = vadd.f32 %v1104, %v1116
      %v1125 = vadd.f32 %v1105, %v1117
      %v1126 = vlaneseq
      %v1127 = vshrl.u32 %v1126, 7
      %v1128 = vsub.s32 0, %v1127
      %v1129 = vrot.slane %v257, %v1128
      %v1130 = vmul.f32 %v1036, %v1129
      %v1131 = vmul.f32 %v1037, %v1129
      %v1132 = vmul.f32 %v1038, %v1129
      %v1133 = vmul.f32 %v1039, %v1129
      %v1134 = vmul.f32 %v1040, %v1129
      %v1135 = vmul.f32 %v1041, %v1129
      %v1136 = vmul.f32 %v1042, %v1129
      %v1137 = vmul.f32 %v1043, %v1129
      %v1138 = vadd.f32 %v1118, %v1130
      %v1139 = vadd.f32 %v1119, %v1131
      %v1140 = vadd.f32 %v1120, %v1132
      %v1141 = vadd.f32 %v1121, %v1133
      %v1142 = vadd.f32 %v1122, %v1134
      %v1143 = vadd.f32 %v1123, %v1135
      %v1144 = vadd.f32 %v1124, %v1136
      %v1145 = vadd.f32 %v1125, %v1137
      %v1146 = vlaneseq
      %v1147 = vshrl.u32 %v1146, 7
      %v1148 = vsub.s32 7, %v1147
      %v1149 = vrot.slane %v257, %v1148
      %v1150 = vmul.f32 %v1037, %v1149
      %v1151 = vmul.f32 %v1038, %v1149
      %v1152 = vmul.f32 %v1039, %v1149
      %v1153 = vmul.f32 %v1040, %v1149
      %v1154 = vmul.f32 %v1041, %v1149
      %v1155 = vmul.f32 %v1042, %v1149
      %v1156 = vmul.f32 %v1043, %v1149
      %v1157 = vmul.f32 %v1044, %v1149
      %v1158 = vadd.f32 %v1138, %v1150
      %v1159 = vadd.f32 %v1139, %v1151
      %v1160 = vadd.f32 %v1140, %v1152
      %v1161 = vadd.f32 %v1141, %v1153
      %v1162 = vadd.f32 %v1142, %v1154
      %v1163 = vadd.f32 %v1143, %v1155
      %v1164 = vadd.f32 %v1144, %v1156
      %v1165 = vadd.f32 %v1145, %v1157
      %v1166 = vlaneseq
      %v1167 = vshrl.u32 %v1166, 7
      %v1168 = vsub.s32 6, %v1167
      %v1169 = vrot.slane %v258, %v1168
      %v1170 = vmul.f32 %v1038, %v1169
      %v1171 = vmul.f32 %v1039, %v1169
      %v1172 = vmul.f32 %v1040, %v1169
      %v1173 = vmul.f32 %v1041, %v1169
      %v1174 = vmul.f32 %v1042, %v1169
      %v1175 = vmul.f32 %v1043, %v1169
      %v1176 = vmul.f32 %v1044, %v1169
      %v1177 = vmul.f32 %v1045, %v1169
      %v1178 = vadd.f32 %v1158, %v1170
      %v1179 = vadd.f32 %v1159, %v1171
      %v1180 = vadd.f32 %v1160, %v1172
      %v1181 = vadd.f32 %v1161, %v1173
      %v1182 = vadd.f32 %v1162, %v1174
      %v1183 = vadd.f32 %v1163, %v1175
      %v1184 = vadd.f32 %v1164, %v1176
      %v1185 = vadd.f32 %v1165, %v1177
      %v1186 = vrot.slane %v265, 2
      %v1187 = vrot.slane %v268, 2
      %v1188 = vrot.slane %v271, 2
      %v1189 = vrot.slane %v274, 2
      %v1190 = vrot.slane %v277, 2
      %v1191 = vrot.slane %v280, 2
      %v1192 = vrot.slane %v283, 2
      %v1193 = vrot.slane %v286, 2
      %v1194 = vrot.slane %v289, 2
      %v1195 = vrot.slane %v292, 2
      %v1196 = vrot.slane %v295, 2
      %v1197 = vrot.slane %v298, 2
      %v1198 = vrot.slane %v301, 2
      %v1199 = vrot.slane %v304, 2
      %v1200 = vrot.slane %v266, 2
      %v1201 = vrot.slane %v269, 2
      %v1202 = vrot.slane %v272, 2
      %v1203 = vrot.slane %v275, 2
      %v1204 = vrot.slane %v278, 2
      %v1205 = vrot.slane %v281, 2
      %v1206 = vrot.slane %v284, 2
      %v1207 = vrot.slane %v287, 2
      %v1208 = vrot.slane %v290, 2
      %v1209 = vrot.slane %v293, 2
      %v1210 = vrot.slane %v296, 2
      %v1211 = vrot.slane %v299, 2
      %v1212 = vrot.slane %v302, 2
      %v1213 = vrot.slane %v305, 2
      %vm1214 = vcmp.lt.s32.totalorder %v341, 6
      %v1215 = vsel %vm1214, %v1186, %v1200
      %v1216 = vsel %vm1214, %v1187, %v1201
      %v1217 = vsel %vm1214, %v1188, %v1202
      %v1218 = vsel %vm1214, %v1189, %v1203
      %v1219 = vsel %vm1214, %v1190, %v1204
      %v1220 = vsel %vm1214, %v1191, %v1205
      %v1221 = vsel %vm1214, %v1192, %v1206
      %v1222 = vsel %vm1214, %v1193, %v1207
      %v1223 = vsel %vm1214, %v1194, %v1208
      %v1224 = vsel %vm1214, %v1195, %v1209
      %v1225 = vsel %vm1214, %v1196, %v1210
      %v1226 = vsel %vm1214, %v1197, %v1211
      %v1227 = vsel %vm1214, %v1198, %v1212
      %v1228 = vsel %vm1214, %v1199, %v1213
      %v1229 = vlaneseq
      %v1230 = vshrl.u32 %v1229, 7
      %v1231 = vsub.s32 5, %v1230
      %v1232 = vrot.slane %v253, %v1231
      %v1233 = vmul.f32 %v1215, %v1232
      %v1234 = vmul.f32 %v1216, %v1232
      %v1235 = vmul.f32 %v1217, %v1232
      %v1236 = vmul.f32 %v1218, %v1232
      %v1237 = vmul.f32 %v1219, %v1232
      %v1238 = vmul.f32 %v1220, %v1232
      %v1239 = vmul.f32 %v1221, %v1232
      %v1240 = vmul.f32 %v1222, %v1232
      %v1241 = vadd.f32 %v1178, %v1233
      %v1242 = vadd.f32 %v1179, %v1234
      %v1243 = vadd.f32 %v1180, %v1235
      %v1244 = vadd.f32 %v1181, %v1236
      %v1245 = vadd.f32 %v1182, %v1237
      %v1246 = vadd.f32 %v1183, %v1238
      %v1247 = vadd.f32 %v1184, %v1239
      %v1248 = vadd.f32 %v1185, %v1240
      %v1249 = vlaneseq
      %v1250 = vshrl.u32 %v1249, 7
      %v1251 = vsub.s32 4, %v1250
      %v1252 = vrot.slane %v254, %v1251
      %v1253 = vmul.f32 %v1216, %v1252
      %v1254 = vmul.f32 %v1217, %v1252
      %v1255 = vmul.f32 %v1218, %v1252
      %v1256 = vmul.f32 %v1219, %v1252
      %v1257 = vmul.f32 %v1220, %v1252
      %v1258 = vmul.f32 %v1221, %v1252
      %v1259 = vmul.f32 %v1222, %v1252
      %v1260 = vmul.f32 %v1223, %v1252
      %v1261 = vadd.f32 %v1241, %v1253
      %v1262 = vadd.f32 %v1242, %v1254
      %v1263 = vadd.f32 %v1243, %v1255
      %v1264 = vadd.f32 %v1244, %v1256
      %v1265 = vadd.f32 %v1245, %v1257
      %v1266 = vadd.f32 %v1246, %v1258
      %v1267 = vadd.f32 %v1247, %v1259
      %v1268 = vadd.f32 %v1248, %v1260
      %v1269 = vlaneseq
      %v1270 = vshrl.u32 %v1269, 7
      %v1271 = vsub.s32 3, %v1270
      %v1272 = vrot.slane %v255, %v1271
      %v1273 = vmul.f32 %v1217, %v1272
      %v1274 = vmul.f32 %v1218, %v1272
      %v1275 = vmul.f32 %v1219, %v1272
      %v1276 = vmul.f32 %v1220, %v1272
      %v1277 = vmul.f32 %v1221, %v1272
      %v1278 = vmul.f32 %v1222, %v1272
      %v1279 = vmul.f32 %v1223, %v1272
      %v1280 = vmul.f32 %v1224, %v1272
      %v1281 = vadd.f32 %v1261, %v1273
      %v1282 = vadd.f32 %v1262, %v1274
      %v1283 = vadd.f32 %v1263, %v1275
      %v1284 = vadd.f32 %v1264, %v1276
      %v1285 = vadd.f32 %v1265, %v1277
      %v1286 = vadd.f32 %v1266, %v1278
      %v1287 = vadd.f32 %v1267, %v1279
      %v1288 = vadd.f32 %v1268, %v1280
      %v1289 = vlaneseq
      %v1290 = vshrl.u32 %v1289, 7
      %v1291 = vsub.s32 2, %v1290
      %v1292 = vrot.slane %v256, %v1291
      %v1293 = vmul.f32 %v1218, %v1292
      %v1294 = vmul.f32 %v1219, %v1292
      %v1295 = vmul.f32 %v1220, %v1292
      %v1296 = vmul.f32 %v1221, %v1292
      %v1297 = vmul.f32 %v1222, %v1292
      %v1298 = vmul.f32 %v1223, %v1292
      %v1299 = vmul.f32 %v1224, %v1292
      %v1300 = vmul.f32 %v1225, %v1292
      %v1301 = vadd.f32 %v1281, %v1293
      %v1302 = vadd.f32 %v1282, %v1294
      %v1303 = vadd.f32 %v1283, %v1295
      %v1304 = vadd.f32 %v1284, %v1296
      %v1305 = vadd.f32 %v1285, %v1297
      %v1306 = vadd.f32 %v1286, %v1298
      %v1307 = vadd.f32 %v1287, %v1299
      %v1308 = vadd.f32 %v1288, %v1300
      %v1309 = vlaneseq
      %v1310 = vshrl.u32 %v1309, 7
      %v1311 = vsub.s32 1, %v1310
      %v1312 = vrot.slane %v257, %v1311
      %v1313 = vmul.f32 %v1219, %v1312
      %v1314 = vmul.f32 %v1220, %v1312
      %v1315 = vmul.f32 %v1221, %v1312
      %v1316 = vmul.f32 %v1222, %v1312
      %v1317 = vmul.f32 %v1223, %v1312
      %v1318 = vmul.f32 %v1224, %v1312
      %v1319 = vmul.f32 %v1225, %v1312
      %v1320 = vmul.f32 %v1226, %v1312
      %v1321 = vadd.f32 %v1301, %v1313
      %v1322 = vadd.f32 %v1302, %v1314
      %v1323 = vadd.f32 %v1303, %v1315
      %v1324 = vadd.f32 %v1304, %v1316
      %v1325 = vadd.f32 %v1305, %v1317
      %v1326 = vadd.f32 %v1306, %v1318
      %v1327 = vadd.f32 %v1307, %v1319
      %v1328 = vadd.f32 %v1308, %v1320
      %v1329 = vlaneseq
      %v1330 = vshrl.u32 %v1329, 7
      %v1331 = vsub.s32 0, %v1330
      %v1332 = vrot.slane %v258, %v1331
      %v1333 = vmul.f32 %v1220, %v1332
      %v1334 = vmul.f32 %v1221, %v1332
      %v1335 = vmul.f32 %v1222, %v1332
      %v1336 = vmul.f32 %v1223, %v1332
      %v1337 = vmul.f32 %v1224, %v1332
      %v1338 = vmul.f32 %v1225, %v1332
      %v1339 = vmul.f32 %v1226, %v1332
      %v1340 = vmul.f32 %v1227, %v1332
      %v1341 = vadd.f32 %v1321, %v1333
      %v1342 = vadd.f32 %v1322, %v1334
      %v1343 = vadd.f32 %v1323, %v1335
      %v1344 = vadd.f32 %v1324, %v1336
      %v1345 = vadd.f32 %v1325, %v1337
      %v1346 = vadd.f32 %v1326, %v1338
      %v1347 = vadd.f32 %v1327, %v1339
      %v1348 = vadd.f32 %v1328, %v1340
      %v1349 = vlaneseq
      %v1350 = vshrl.u32 %v1349, 7
      %v1351 = vsub.s32 7, %v1350
      %v1352 = vrot.slane %v258, %v1351
      %v1353 = vmul.f32 %v1221, %v1352
      %v1354 = vmul.f32 %v1222, %v1352
      %v1355 = vmul.f32 %v1223, %v1352
      %v1356 = vmul.f32 %v1224, %v1352
      %v1357 = vmul.f32 %v1225, %v1352
      %v1358 = vmul.f32 %v1226, %v1352
      %v1359 = vmul.f32 %v1227, %v1352
      %v1360 = vmul.f32 %v1228, %v1352
      %v1361 = vadd.f32 %v1341, %v1353
      %v1362 = vadd.f32 %v1342, %v1354
      %v1363 = vadd.f32 %v1343, %v1355
      %v1364 = vadd.f32 %v1344, %v1356
      %v1365 = vadd.f32 %v1345, %v1357
      %v1366 = vadd.f32 %v1346, %v1358
      %v1367 = vadd.f32 %v1347, %v1359
      %v1368 = vadd.f32 %v1348, %v1360
      %v1369 = vrot.slane %v265, 3
      %v1370 = vrot.slane %v268, 3
      %v1371 = vrot.slane %v271, 3
      %v1372 = vrot.slane %v274, 3
      %v1373 = vrot.slane %v277, 3
      %v1374 = vrot.slane %v280, 3
      %v1375 = vrot.slane %v283, 3
      %v1376 = vrot.slane %v286, 3
      %v1377 = vrot.slane %v289, 3
      %v1378 = vrot.slane %v292, 3
      %v1379 = vrot.slane %v295, 3
      %v1380 = vrot.slane %v298, 3
      %v1381 = vrot.slane %v301, 3
      %v1382 = vrot.slane %v304, 3
      %v1383 = vrot.slane %v266, 3
      %v1384 = vrot.slane %v269, 3
      %v1385 = vrot.slane %v272, 3
      %v1386 = vrot.slane %v275, 3
      %v1387 = vrot.slane %v278, 3
      %v1388 = vrot.slane %v281, 3
      %v1389 = vrot.slane %v284, 3
      %v1390 = vrot.slane %v287, 3
      %v1391 = vrot.slane %v290, 3
      %v1392 = vrot.slane %v293, 3
      %v1393 = vrot.slane %v296, 3
      %v1394 = vrot.slane %v299, 3
      %v1395 = vrot.slane %v302, 3
      %v1396 = vrot.slane %v305, 3
      %vm1397 = vcmp.lt.s32.totalorder %v341, 5
      %v1398 = vsel %vm1397, %v1369, %v1383
      %v1399 = vsel %vm1397, %v1370, %v1384
      %v1400 = vsel %vm1397, %v1371, %v1385
      %v1401 = vsel %vm1397, %v1372, %v1386
      %v1402 = vsel %vm1397, %v1373, %v1387
      %v1403 = vsel %vm1397, %v1374, %v1388
      %v1404 = vsel %vm1397, %v1375, %v1389
      %v1405 = vsel %vm1397, %v1376, %v1390
      %v1406 = vsel %vm1397, %v1377, %v1391
      %v1407 = vsel %vm1397, %v1378, %v1392
      %v1408 = vsel %vm1397, %v1379, %v1393
      %v1409 = vsel %vm1397, %v1380, %v1394
      %v1410 = vsel %vm1397, %v1381, %v1395
      %v1411 = vsel %vm1397, %v1382, %v1396
      %v1412 = vlaneseq
      %v1413 = vshrl.u32 %v1412, 7
      %v1414 = vsub.s32 6, %v1413
      %v1415 = vrot.slane %v253, %v1414
      %v1416 = vmul.f32 %v1398, %v1415
      %v1417 = vmul.f32 %v1399, %v1415
      %v1418 = vmul.f32 %v1400, %v1415
      %v1419 = vmul.f32 %v1401, %v1415
      %v1420 = vmul.f32 %v1402, %v1415
      %v1421 = vmul.f32 %v1403, %v1415
      %v1422 = vmul.f32 %v1404, %v1415
      %v1423 = vmul.f32 %v1405, %v1415
      %v1424 = vadd.f32 %v1361, %v1416
      %v1425 = vadd.f32 %v1362, %v1417
      %v1426 = vadd.f32 %v1363, %v1418
      %v1427 = vadd.f32 %v1364, %v1419
      %v1428 = vadd.f32 %v1365, %v1420
      %v1429 = vadd.f32 %v1366, %v1421
      %v1430 = vadd.f32 %v1367, %v1422
      %v1431 = vadd.f32 %v1368, %v1423
      %v1432 = vlaneseq
      %v1433 = vshrl.u32 %v1432, 7
      %v1434 = vsub.s32 5, %v1433
      %v1435 = vrot.slane %v254, %v1434
      %v1436 = vmul.f32 %v1399, %v1435
      %v1437 = vmul.f32 %v1400, %v1435
      %v1438 = vmul.f32 %v1401, %v1435
      %v1439 = vmul.f32 %v1402, %v1435
      %v1440 = vmul.f32 %v1403, %v1435
      %v1441 = vmul.f32 %v1404, %v1435
      %v1442 = vmul.f32 %v1405, %v1435
      %v1443 = vmul.f32 %v1406, %v1435
      %v1444 = vadd.f32 %v1424, %v1436
      %v1445 = vadd.f32 %v1425, %v1437
      %v1446 = vadd.f32 %v1426, %v1438
      %v1447 = vadd.f32 %v1427, %v1439
      %v1448 = vadd.f32 %v1428, %v1440
      %v1449 = vadd.f32 %v1429, %v1441
      %v1450 = vadd.f32 %v1430, %v1442
      %v1451 = vadd.f32 %v1431, %v1443
      %v1452 = vlaneseq
      %v1453 = vshrl.u32 %v1452, 7
      %v1454 = vsub.s32 4, %v1453
      %v1455 = vrot.slane %v255, %v1454
      %v1456 = vmul.f32 %v1400, %v1455
      %v1457 = vmul.f32 %v1401, %v1455
      %v1458 = vmul.f32 %v1402, %v1455
      %v1459 = vmul.f32 %v1403, %v1455
      %v1460 = vmul.f32 %v1404, %v1455
      %v1461 = vmul.f32 %v1405, %v1455
      %v1462 = vmul.f32 %v1406, %v1455
      %v1463 = vmul.f32 %v1407, %v1455
      %v1464 = vadd.f32 %v1444, %v1456
      %v1465 = vadd.f32 %v1445, %v1457
      %v1466 = vadd.f32 %v1446, %v1458
      %v1467 = vadd.f32 %v1447, %v1459
      %v1468 = vadd.f32 %v1448, %v1460
      %v1469 = vadd.f32 %v1449, %v1461
      %v1470 = vadd.f32 %v1450, %v1462
      %v1471 = vadd.f32 %v1451, %v1463
      %v1472 = vlaneseq
      %v1473 = vshrl.u32 %v1472, 7
      %v1474 = vsub.s32 3, %v1473
      %v1475 = vrot.slane %v256, %v1474
      %v1476 = vmul.f32 %v1401, %v1475
      %v1477 = vmul.f32 %v1402, %v1475
      %v1478 = vmul.f32 %v1403, %v1475
      %v1479 = vmul.f32 %v1404, %v1475
      %v1480 = vmul.f32 %v1405, %v1475
      %v1481 = vmul.f32 %v1406, %v1475
      %v1482 = vmul.f32 %v1407, %v1475
      %v1483 = vmul.f32 %v1408, %v1475
      %v1484 = vadd.f32 %v1464, %v1476
      %v1485 = vadd.f32 %v1465, %v1477
      %v1486 = vadd.f32 %v1466, %v1478
      %v1487 = vadd.f32 %v1467, %v1479
      %v1488 = vadd.f32 %v1468, %v1480
      %v1489 = vadd.f32 %v1469, %v1481
      %v1490 = vadd.f32 %v1470, %v1482
      %v1491 = vadd.f32 %v1471, %v1483
      %v1492 = vlaneseq
      %v1493 = vshrl.u32 %v1492, 7
      %v1494 = vsub.s32 2, %v1493
      %v1495 = vrot.slane %v257, %v1494
      %v1496 = vmul.f32 %v1402, %v1495
      %v1497 = vmul.f32 %v1403, %v1495
      %v1498 = vmul.f32 %v1404, %v1495
      %v1499 = vmul.f32 %v1405, %v1495
      %v1500 = vmul.f32 %v1406, %v1495
      %v1501 = vmul.f32 %v1407, %v1495
      %v1502 = vmul.f32 %v1408, %v1495
      %v1503 = vmul.f32 %v1409, %v1495
      %v1504 = vadd.f32 %v1484, %v1496
      %v1505 = vadd.f32 %v1485, %v1497
      %v1506 = vadd.f32 %v1486, %v1498
      %v1507 = vadd.f32 %v1487, %v1499
      %v1508 = vadd.f32 %v1488, %v1500
      %v1509 = vadd.f32 %v1489, %v1501
      %v1510 = vadd.f32 %v1490, %v1502
      %v1511 = vadd.f32 %v1491, %v1503
      %v1512 = vlaneseq
      %v1513 = vshrl.u32 %v1512, 7
      %v1514 = vsub.s32 1, %v1513
      %v1515 = vrot.slane %v258, %v1514
      %v1516 = vmul.f32 %v1403, %v1515
      %v1517 = vmul.f32 %v1404, %v1515
      %v1518 = vmul.f32 %v1405, %v1515
      %v1519 = vmul.f32 %v1406, %v1515
      %v1520 = vmul.f32 %v1407, %v1515
      %v1521 = vmul.f32 %v1408, %v1515
      %v1522 = vmul.f32 %v1409, %v1515
      %v1523 = vmul.f32 %v1410, %v1515
      %v1524 = vadd.f32 %v1504, %v1516
      %v1525 = vadd.f32 %v1505, %v1517
      %v1526 = vadd.f32 %v1506, %v1518
      %v1527 = vadd.f32 %v1507, %v1519
      %v1528 = vadd.f32 %v1508, %v1520
      %v1529 = vadd.f32 %v1509, %v1521
      %v1530 = vadd.f32 %v1510, %v1522
      %v1531 = vadd.f32 %v1511, %v1523
      %v1532 = vlaneseq
      %v1533 = vshrl.u32 %v1532, 7
      %v1534 = vsub.s32 0, %v1533
      %v1535 = vrot.slane %v259, %v1534
      %v1536 = vmul.f32 %v1404, %v1535
      %v1537 = vmul.f32 %v1405, %v1535
      %v1538 = vmul.f32 %v1406, %v1535
      %v1539 = vmul.f32 %v1407, %v1535
      %v1540 = vmul.f32 %v1408, %v1535
      %v1541 = vmul.f32 %v1409, %v1535
      %v1542 = vmul.f32 %v1410, %v1535
      %v1543 = vmul.f32 %v1411, %v1535
      %v1544 = vadd.f32 %v1524, %v1536
      %v1545 = vadd.f32 %v1525, %v1537
      %v1546 = vadd.f32 %v1526, %v1538
      %v1547 = vadd.f32 %v1527, %v1539
      %v1548 = vadd.f32 %v1528, %v1540
      %v1549 = vadd.f32 %v1529, %v1541
      %v1550 = vadd.f32 %v1530, %v1542
      %v1551 = vadd.f32 %v1531, %v1543
      %1552 = vst [vmem:[%s192] sm:$0xff] %v1544
      %1553 = vst [vmem:[%s192 + $0x8] sm:$0xff] %v1545
      %1554 = vst [vmem:[%s192 + $0x10] sm:$0xff] %v1546
      %1555 = vst [vmem:[%s192 + $0x18] sm:$0xff] %v1547
      %1556 = vst [vmem:[%s192 + $0x20] sm:$0xff] %v1548
      %1557 = vst [vmem:[%s192 + $0x28] sm:$0xff] %v1549
      %1558 = vst [vmem:[%s192 + $0x30] sm:$0xff] %v1550
      %1559 = vst [vmem:[%s192 + $0x38] sm:$0xf] %v1551
      %s1560 = smul.u32 8, %s19
      %p1561 = scmp.lt.s32.totalorder %s18, 1
      %s1562 = scalar_select %p1561, %s18, 1
      %p1563 = scmp.lt.s32.totalorder %s1560, 7
      %s1564 = scalar_select %p1563, %s1560, 7
      %s1565 = smul.addr %s1562, 8
      %s1566 = sadd.s32 %s1564, %s1565
      %s1567 = smul.addr %s1566, 8
      %s1568 = scalar_lea.vmem %s3, %s1567
      // Predicated region
      $region37: #{tpu_custom_call.1} parent=31 // pred_check
        %p1569 = pneg %p114
      $region38: #{tpu_custom_call.1} parent=31 // pred_check_branch
        %1571 = sbr.rel (%p1569) target = $region40
      $region39: #{tpu_custom_call.1} parent=31 // pred_region
        %s1572 = smul.u32 8, %s19
      $region40: #{tpu_custom_call.1} parent=31 // pred_fallthru
        _
    $region32: #{tpu_custom_call.1} parent=5 // pred_fallthru
      _
    %p1573 = scmp.le.s32.totalorder 2, %s9
    // Predicated region
    $region41: #{tpu_custom_call.1} parent=5 // pred_check
      %p1574 = pneg %p1573
    $region42: #{tpu_custom_call.1} parent=5 // pred_check_branch
      %1576 = sbr.rel (%p1574) target = $region44
    $region43: #{tpu_custom_call.1} parent=5 // pred_region
      %s1577 = ssub.s32 %s9, 2
      // Predicated region
      $region45: #{tpu_custom_call.1} parent=43 // pred_check
        %p1578 = pneg %p120
      $region46: #{tpu_custom_call.1} parent=43 // pred_check_branch
        %1580 = sbr.rel (%p1578) target = $region48
      $region47: #{tpu_custom_call.1} parent=43 // pred_region
        %s1581 = smul.u32 8, %s21
        %p1582 = scmp.lt.s32.totalorder %s20, 1
        %s1583 = scalar_select %p1582, %s20, 1
        %p1584 = scmp.lt.s32.totalorder %s1581, 7
        %s1585 = scalar_select %p1584, %s1581, 7
        %s1586 = smul.addr %s1583, 8
        %s1587 = sadd.s32 %s1585, %s1586
        %s1588 = smul.addr %s1587, 8
        %s1589 = scalar_lea.vmem %s3, %s1588
      $region48: #{tpu_custom_call.1} parent=43 // pred_fallthru
        _
    $region44: #{tpu_custom_call.1} parent=5 // pred_fallthru
      _
  $region6: #{tpu_custom_call.1} parent=0 // loop_footer
    %s13 = sadd.s32 1, %s9
  $region7: #{tpu_custom_call.1} parent=0 // loop_footer_branch
    %8 = sbr.rel target = $region3
  $region8: #{tpu_custom_call.1} parent=0 // loop_exit
    _

</llo_original>
